<compile_context>
chip_gen: v7x
topology: tpu7x:2x2x1
jax: 0.10.0
libtpu: 0.0.40
codegen_flags: <defaults>
</compile_context>

<pallas_src>
import functools

import numpy as np
import jax
import jax.numpy as jnp
from jax import lax
from jax.experimental import pallas as pl
from jax.experimental.pallas import tpu as pltpu


def _gelu(x):
    return 0.5 * x * (1.0 + jnp.tanh(
        jnp.sqrt(2.0 / jnp.pi) * (x + 0.044715 * x * x * x)))


def _layer_norm(x, g, b, eps=1e-5):
    u = jnp.mean(x, axis=-1, keepdims=True)
    s = jnp.mean((x - u) ** 2, axis=-1, keepdims=True)
    return (x - u) / jnp.sqrt(s + eps) * g + b


def block_kernel(x_ref,
                 ln1_g_ref, ln1_b_ref,
                 attn_w_ref, attn_b_ref,
                 attn_pw_ref, attn_pb_ref,
                 ln2_g_ref, ln2_b_ref,
                 fc_w_ref, fc_b_ref,
                 proj_w_ref, proj_b_ref,
                 out_ref, present_ref,
                 *, n_head, q_tile, kv_tile, matmul_dtype):
    f32 = jnp.float32
    x = x_ref[0]                                   # (T, E), f32
    T, E = x.shape
    hd = E // n_head

    def mm(a, w):
        # MXU matmul; cast operands to the (possibly bf16) weight dtype,
        # accumulate in f32.
        return jnp.dot(a.astype(w.dtype), w, preferred_element_type=f32)

    # ---- ln_1 + fused qkv projection (one big lane-dense GEMM) ----
    h = _layer_norm(x, ln1_g_ref[...], ln1_b_ref[...])
    qkv = mm(h, attn_w_ref[...]) + attn_b_ref[...]            # (T, 3E) f32
    q = qkv[:, 0 * E:1 * E]
    k = qkv[:, 1 * E:2 * E]
    v = qkv[:, 2 * E:3 * E]

    # present in merged-head (T, E) layout -> lane-dense (unmasked) stores;
    # the wrapper reshapes to (2, B, n_head, T, head_dim).
    present_ref[0, 0] = k
    present_ref[1, 0] = v

    num_q = (T + q_tile - 1) // q_tile             # static python ints
    num_k = (T + kv_tile - 1) // kv_tile

    for qi in range(num_q):
        q0 = qi * q_tile
        q1 = min(q0 + q_tile, T)
        tq = q1 - q0

        # per-head q slices, hoisted out of the kv loop (slices aren't views)
        q_heads = [q[q0:q1, hh * hd:(hh + 1) * hd].astype(matmul_dtype)
                   for hh in range(n_head)]

        # flash-style online-softmax state, per head
        m_s = [jnp.full((tq, 1), -jnp.inf, f32) for _ in range(n_head)]
        l_s = [jnp.zeros((tq, 1), f32) for _ in range(n_head)]
        a_s = [jnp.zeros((tq, hd), f32) for _ in range(n_head)]

        for ki in range(num_k):
            k0 = ki * kv_tile
            if k0 > q1 - 1:                        # tile fully above the diagonal
                break                              # (and so are all later tiles)
            k1 = min(k0 + kv_tile, T)
            tk = k1 - k0

            # causal mask for this (q-tile, kv-tile), hoisted out of the head
            # loop; fully-visible tiles need no mask at all.
            if k1 - 1 > q0:
                rows = lax.broadcasted_iota(jnp.int32, (tq, tk), 0) + q0
                cols = lax.broadcasted_iota(jnp.int32, (tq, tk), 1) + k0
                vis = rows >= cols
            else:
                vis = None

            for hh in range(n_head):
                c0, c1 = hh * hd, (hh + 1) * hd
                ks = k[k0:k1, c0:c1].astype(matmul_dtype)
                vs = v[k0:k1, c0:c1].astype(matmul_dtype)

                # scores (scale=False, matching the module default)
                s = lax.dot_general(q_heads[hh], ks,
                                    (((1,), (1,)), ((), ())),
                                    preferred_element_type=f32)   # (tq, tk)
                if vis is not None:
                    s = jnp.where(vis, s, -1.0e10)

                m_new = jnp.maximum(m_s[hh], jnp.max(s, axis=-1, keepdims=True))
                alpha = jnp.exp(m_s[hh] - m_new)
                p = jnp.exp(s - m_new)
                l_s[hh] = alpha * l_s[hh] + jnp.sum(p, axis=-1, keepdims=True)
                a_s[hh] = alpha * a_s[hh] + jnp.dot(
                    p.astype(matmul_dtype), vs, preferred_element_type=f32)
                m_s[hh] = m_new

        # normalize (reciprocal on the EUP slot) and merge heads with a lane
        # concat -- no 3-D transposes.
        attn_t = jnp.concatenate(
            [a_s[hh] * pl.reciprocal(l_s[hh], approx=True)
             for hh in range(n_head)], axis=-1)                   # (tq, E)

        # attention output projection + residual 1
        a_proj = mm(attn_t, attn_pw_ref[...]) + attn_pb_ref[...]
        x1 = x[q0:q1, :] + a_proj

        # ln_2 + MLP + residual 2 (per q-tile: only (tq, 4E) resident)
        h2 = _layer_norm(x1, ln2_g_ref[...], ln2_b_ref[...])
        m1 = _gelu(mm(h2, fc_w_ref[...]) + fc_b_ref[...])
        m2 = mm(m1, proj_w_ref[...]) + proj_b_ref[...]
        out_ref[0, q0:q1, :] = x1 + m2


def make_block_params(key, n_embd):
    E = n_embd
    ks = jax.random.split(key, 4)
    std = 0.02
    return dict(
        ln1_g=jnp.ones((1, E), jnp.float32),
        ln1_b=jnp.zeros((1, E), jnp.float32),
        attn_w=jax.random.normal(ks[0], (E, 3 * E), jnp.float32) * std,
        attn_b=jnp.zeros((1, 3 * E), jnp.float32),
        attn_pw=jax.random.normal(ks[1], (E, E), jnp.float32) * std,
        attn_pb=jnp.zeros((1, E), jnp.float32),
        ln2_g=jnp.ones((1, E), jnp.float32),
        ln2_b=jnp.zeros((1, E), jnp.float32),
        fc_w=jax.random.normal(ks[2], (E, 4 * E), jnp.float32) * std,
        fc_b=jnp.zeros((1, 4 * E), jnp.float32),
        proj_w=jax.random.normal(ks[3], (4 * E, E), jnp.float32) * std,
        proj_b=jnp.zeros((1, E), jnp.float32),
    )


def _vmem_limit_bytes(T, E, q_tile, kv_tile, matmul_dtype):
    wb = np.dtype(matmul_dtype).itemsize
    weights = (3 * E * E + E * E + 4 * E * E + 4 * E * E) * wb + 16 * E * 4
    io = 4 * T * E * 4                       # x tile, out tile, present (2,T,E)
    acts = (3 * T * E + q_tile * kv_tile * 2 + q_tile * 4 * E + 4 * T * E) * 4
    est = 2 * (weights + io) + acts          # 2x: pipelined blocks double-buffer
    return int(max(8 << 20, min(2 * est, 48 << 20)))


def block_forward(x, params, n_head, *, q_tile=256, kv_tile=256,
                  matmul_dtype=jnp.float32):
    """matmul_dtype=jnp.bfloat16 halves weight VMEM/HBM traffic on v6e/v7x
    (f32 accumulation is kept); LayerNorm/softmax/GELU always stay f32."""
    B, T, E = x.shape
    hd = E // n_head
    q_tile = min(q_tile, T)
    kv_tile = min(kv_tile, T)

    # cast only the big GEMM weights; LN params and biases stay f32
    wp = dict(params)
    for name in ("attn_w", "attn_pw", "fc_w", "proj_w"):
        wp[name] = params[name].astype(matmul_dtype)

    p_order = ("ln1_g", "ln1_b", "attn_w", "attn_b", "attn_pw", "attn_pb",
               "ln2_g", "ln2_b", "fc_w", "fc_b", "proj_w", "proj_b")
    weight_args = [wp[name] for name in p_order]

    def full_spec(shape):
        nd = len(shape)
        return pl.BlockSpec(shape, lambda b, _nd=nd: (0,) * _nd)

    out_shapes = (
        jax.ShapeDtypeStruct((B, T, E), jnp.float32),
        jax.ShapeDtypeStruct((2, B, T, E), jnp.float32),   # lane-dense present
    )

    kern = functools.partial(block_kernel, n_head=n_head, q_tile=q_tile,
                             kv_tile=kv_tile, matmul_dtype=matmul_dtype)

    flops = (2 * B * T * E * 3 * E            # c_attn
             + 2 * B * T * T * E * 2          # qk^T + pv (ignoring causal skip)
             + 2 * B * T * E * E              # c_proj
             + 2 * B * T * E * 4 * E * 2)     # fc + proj
    transcendentals = B * n_head * T * T + B * T * 4 * E + B * T * n_head
    weight_bytes = sum(int(w.size) * np.dtype(w.dtype).itemsize
                       for w in weight_args)
    bytes_accessed = 4 * (x.size + B * T * E + 2 * B * T * E) + B * weight_bytes

    out, present_flat = pl.pallas_call(
        kern,
        out_shape=out_shapes,
        grid_spec=pltpu.PrefetchScalarGridSpec(
            num_scalar_prefetch=0,
            grid=(B,),
            in_specs=[pl.BlockSpec((1, T, E), lambda b: (b, 0, 0))]
                     + [full_spec(w.shape) for w in weight_args],
            out_specs=[
                pl.BlockSpec((1, T, E), lambda b: (b, 0, 0)),
                pl.BlockSpec((2, 1, T, E), lambda b: (0, b, 0, 0)),
            ],
        ),
        compiler_params=pltpu.CompilerParams(
            dimension_semantics=("parallel",),
            vmem_limit_bytes=_vmem_limit_bytes(T, E, q_tile, kv_tile,
                                               matmul_dtype)),
        cost_estimate=pl.CostEstimate(flops=int(flops),
                                      transcendentals=int(transcendentals),
                                      bytes_accessed=int(bytes_accessed)),
    )(x, *weight_args)

    # cheap wrapper-side layout change: (2,B,T,E) -> (2,B,n_head,T,head_dim)
    present = jnp.transpose(present_flat.reshape(2, B, T, n_head, hd),
                            (0, 1, 3, 2, 4))
    return out, present


# ---- pure-JAX reference (mirrors the PyTorch module) ----
def block_reference(x, params, n_head):
    B, T, E = x.shape
    hd = E // n_head

    def ln(x, g, b):
        u = jnp.mean(x, -1, keepdims=True)
        s = jnp.mean((x - u) ** 2, -1, keepdims=True)
        return (x - u) / jnp.sqrt(s + 1e-5) * g[0] + b[0]

    h = ln(x, params["ln1_g"], params["ln1_b"])
    qkv = h @ params["attn_w"] + params["attn_b"][0]
    q, k, v = jnp.split(qkv, 3, axis=-1)

    def split_heads(t):
        return jnp.transpose(t.reshape(B, T, n_head, hd), (0, 2, 1, 3))

    qh, kh, vh = split_heads(q), split_heads(k), split_heads(v)
    present = jnp.stack((kh, vh))  # key.transpose(-2,-1) == kh

    w = jnp.einsum('bhtd,bhsd->bhts', qh, kh)
    bias = jnp.tril(jnp.ones((T, T), jnp.float32))
    w = w * bias - 1e10 * (1 - bias)
    w = jax.nn.softmax(w, axis=-1)
    a = jnp.einsum('bhts,bhsd->bhtd', w, vh)
    a = jnp.transpose(a, (0, 2, 1, 3)).reshape(B, T, E)
    a = a @ params["attn_pw"] + params["attn_pb"][0]

    x1 = x + a
    h2 = ln(x1, params["ln2_g"], params["ln2_b"])
    m = h2 @ params["fc_w"] + params["fc_b"][0]
    m = 0.5 * m * (1 + jnp.tanh(jnp.sqrt(2 / jnp.pi) * (m + 0.044715 * m ** 3)))
    m = m @ params["proj_w"] + params["proj_b"][0]
    return x1 + m, present


if __name__ == "__main__":
    B, T, E, n_head = 2, 8, 32, 4

    key = jax.random.PRNGKey(0)
    kx, kp = jax.random.split(key)
    x = jax.random.normal(kx, (B, T, E), jnp.float32)
    params = make_block_params(kp, E)

    out, present = block_forward(x, params, n_head)   # f32 path for the check
    out = jax.block_until_ready(out)
    present = jax.block_until_ready(present)

    ref_out, ref_present = block_reference(x, params, n_head)
    # out tolerance slightly relaxed because the softmax normalization uses the
    # approximate EUP reciprocal (pl.reciprocal(..., approx=True)).
    assert jnp.allclose(out, ref_out, atol=2e-3, rtol=2e-3), "output mismatch"
    assert jnp.allclose(present, ref_present, atol=1e-4, rtol=1e-4), "present mismatch"

    print("KERNEL_OK")
</pallas_src>

<mosaic_0001>
module attributes {stable_mosaic.version = 11 : i64} {
  func.func @block_kernel(%arg0: i32, %arg1: memref<1x8x32xf32, #tpu.memory_space<vmem>>, %arg2: memref<1x32xf32, #tpu.memory_space<vmem>>, %arg3: memref<1x32xf32, #tpu.memory_space<vmem>>, %arg4: memref<32x96xf32, #tpu.memory_space<vmem>>, %arg5: memref<1x96xf32, #tpu.memory_space<vmem>>, %arg6: memref<32x32xf32, #tpu.memory_space<vmem>>, %arg7: memref<1x32xf32, #tpu.memory_space<vmem>>, %arg8: memref<1x32xf32, #tpu.memory_space<vmem>>, %arg9: memref<1x32xf32, #tpu.memory_space<vmem>>, %arg10: memref<32x128xf32, #tpu.memory_space<vmem>>, %arg11: memref<1x128xf32, #tpu.memory_space<vmem>>, %arg12: memref<128x32xf32, #tpu.memory_space<vmem>>, %arg13: memref<1x32xf32, #tpu.memory_space<vmem>>, %arg14: memref<1x8x32xf32, #tpu.memory_space<vmem>>, %arg15: memref<2x1x8x32xf32, #tpu.memory_space<vmem>>) attributes {dimension_semantics = [#tpu.dimension_semantics<parallel>], iteration_bounds = array<i64: 2>, scalar_prefetch = 0 : i64, scratch_operands = 0 : i64, tpu.core_type = #tpu.core_type<tc>, window_params = [{transform_indices = @transform_0, window_bounds = array<i64: 1, 8, 32>}, {pipeline_mode = #tpu.pipeline_mode<synchronous>, transform_indices = @transform_1, window_bounds = array<i64: 1, 32>}, {pipeline_mode = #tpu.pipeline_mode<synchronous>, transform_indices = @transform_2, window_bounds = array<i64: 1, 32>}, {pipeline_mode = #tpu.pipeline_mode<synchronous>, transform_indices = @transform_3, window_bounds = array<i64: 32, 96>}, {pipeline_mode = #tpu.pipeline_mode<synchronous>, transform_indices = @transform_4, window_bounds = array<i64: 1, 96>}, {pipeline_mode = #tpu.pipeline_mode<synchronous>, transform_indices = @transform_5, window_bounds = array<i64: 32, 32>}, {pipeline_mode = #tpu.pipeline_mode<synchronous>, transform_indices = @transform_6, window_bounds = array<i64: 1, 32>}, {pipeline_mode = #tpu.pipeline_mode<synchronous>, transform_indices = @transform_7, window_bounds = array<i64: 1, 32>}, {pipeline_mode = #tpu.pipeline_mode<synchronous>, transform_indices = @transform_8, window_bounds = array<i64: 1, 32>}, {pipeline_mode = #tpu.pipeline_mode<synchronous>, transform_indices = @transform_9, window_bounds = array<i64: 32, 128>}, {pipeline_mode = #tpu.pipeline_mode<synchronous>, transform_indices = @transform_10, window_bounds = array<i64: 1, 128>}, {pipeline_mode = #tpu.pipeline_mode<synchronous>, transform_indices = @transform_11, window_bounds = array<i64: 128, 32>}, {pipeline_mode = #tpu.pipeline_mode<synchronous>, transform_indices = @transform_12, window_bounds = array<i64: 1, 32>}, {transform_indices = @transform_13, window_bounds = array<i64: 1, 8, 32>}, {transform_indices = @transform_14, window_bounds = array<i64: 2, 1, 8, 32>}]} {
    %c0 = arith.constant 0 : index
    %c0_0 = arith.constant 0 : index
    %c0_1 = arith.constant 0 : index
    %0 = vector.load %arg1[%c0, %c0_0, %c0_1] : memref<1x8x32xf32, #tpu.memory_space<vmem>>, vector<1x8x32xf32>
    %1 = vector.shape_cast %0 : vector<1x8x32xf32> to vector<8x32xf32>
    %c0_2 = arith.constant 0 : index
    %c0_3 = arith.constant 0 : index
    %2 = vector.load %arg2[%c0_2, %c0_3] : memref<1x32xf32, #tpu.memory_space<vmem>>, vector<1x32xf32>
    %c0_4 = arith.constant 0 : index
    %c0_5 = arith.constant 0 : index
    %3 = vector.load %arg3[%c0_4, %c0_5] : memref<1x32xf32, #tpu.memory_space<vmem>>, vector<1x32xf32>
    %cst = arith.constant dense<0.000000e+00> : vector<8xf32>
    %4 = vector.multi_reduction <add>, %1, %cst [1] : vector<8x32xf32> to vector<8xf32>
    %5 = vector.shape_cast %4 : vector<8xf32> to vector<8x1xf32>
    %cst_6 = arith.constant 3.200000e+01 : f32
    %6 = vector.broadcast %cst_6 : f32 to vector<8x1xf32>
    %7 = arith.divf %5, %6 : vector<8x1xf32>
    %8 = vector.broadcast %7 : vector<8x1xf32> to vector<8x32xf32>
    %9 = arith.subf %1, %8 : vector<8x32xf32>
    %10 = arith.mulf %9, %9 : vector<8x32xf32>
    %cst_7 = arith.constant dense<0.000000e+00> : vector<8xf32>
    %11 = vector.multi_reduction <add>, %10, %cst_7 [1] : vector<8x32xf32> to vector<8xf32>
    %12 = vector.shape_cast %11 : vector<8xf32> to vector<8x1xf32>
    %cst_8 = arith.constant 3.200000e+01 : f32
    %13 = vector.broadcast %cst_8 : f32 to vector<8x1xf32>
    %14 = arith.divf %12, %13 : vector<8x1xf32>
    %15 = vector.broadcast %7 : vector<8x1xf32> to vector<8x32xf32>
    %16 = arith.subf %1, %15 : vector<8x32xf32>
    %cst_9 = arith.constant 9.99999974E-6 : f32
    %17 = vector.broadcast %cst_9 : f32 to vector<8x1xf32>
    %18 = arith.addf %14, %17 : vector<8x1xf32>
    %19 = math.sqrt %18 : vector<8x1xf32>
    %20 = vector.broadcast %19 : vector<8x1xf32> to vector<8x32xf32>
    %21 = arith.divf %16, %20 : vector<8x32xf32>
    %22 = vector.broadcast %2 : vector<1x32xf32> to vector<8x32xf32>
    %23 = arith.mulf %21, %22 : vector<8x32xf32>
    %24 = vector.broadcast %3 : vector<1x32xf32> to vector<8x32xf32>
    %25 = arith.addf %23, %24 : vector<8x32xf32>
    %c0_10 = arith.constant 0 : index
    %c0_11 = arith.constant 0 : index
    %26 = vector.load %arg4[%c0_10, %c0_11] : memref<32x96xf32, #tpu.memory_space<vmem>>, vector<32x96xf32>
    %cst_12 = arith.constant dense<0.000000e+00> : vector<8x96xf32>
    %27 = tpu.matmul %25, %26, %cst_12 {dimension_numbers = #tpu.dot_dimension_numbers<[1], [0], [0], [1], [0, 0, 1, 1], [], []>} : vector<8x32xf32>, vector<32x96xf32>, vector<8x96xf32> -> vector<8x96xf32>
    %c0_13 = arith.constant 0 : index
    %c0_14 = arith.constant 0 : index
    %28 = vector.load %arg5[%c0_13, %c0_14] : memref<1x96xf32, #tpu.memory_space<vmem>>, vector<1x96xf32>
    %29 = vector.broadcast %28 : vector<1x96xf32> to vector<8x96xf32>
    %30 = arith.addf %27, %29 : vector<8x96xf32>
    %31 = vector.extract_strided_slice %30 {offsets = [0, 0], sizes = [8, 32], strides = [1, 1]} : vector<8x96xf32> to vector<8x32xf32>
    %32 = vector.extract_strided_slice %30 {offsets = [0, 32], sizes = [8, 32], strides = [1, 1]} : vector<8x96xf32> to vector<8x32xf32>
    %33 = vector.extract_strided_slice %30 {offsets = [0, 64], sizes = [8, 32], strides = [1, 1]} : vector<8x96xf32> to vector<8x32xf32>
    %c0_15 = arith.constant 0 : index
    %c0_16 = arith.constant 0 : index
    %c0_17 = arith.constant 0 : index
    %c0_18 = arith.constant 0 : index
    %34 = vector.load %arg15[%c0_15, %c0_16, %c0_17, %c0_18] : memref<2x1x8x32xf32, #tpu.memory_space<vmem>>, vector<1x1x8x32xf32>
    %35 = vector.shape_cast %34 : vector<1x1x8x32xf32> to vector<8x32xf32>
    %36 = vector.shape_cast %32 : vector<8x32xf32> to vector<1x1x8x32xf32>
    tpu.vector_store %arg15[%c0_15, %c0_16, %c0_17, %c0_18], %36 {strides = array<i32>} : memref<2x1x8x32xf32, #tpu.memory_space<vmem>>, vector<1x1x8x32xf32>,
    %c1 = arith.constant 1 : index
    %c0_19 = arith.constant 0 : index
    %c0_20 = arith.constant 0 : index
    %c0_21 = arith.constant 0 : index
    %37 = vector.load %arg15[%c1, %c0_19, %c0_20, %c0_21] : memref<2x1x8x32xf32, #tpu.memory_space<vmem>>, vector<1x1x8x32xf32>
    %38 = vector.shape_cast %37 : vector<1x1x8x32xf32> to vector<8x32xf32>
    %39 = vector.shape_cast %33 : vector<8x32xf32> to vector<1x1x8x32xf32>
    tpu.vector_store %arg15[%c1, %c0_19, %c0_20, %c0_21], %39 {strides = array<i32>} : memref<2x1x8x32xf32, #tpu.memory_space<vmem>>, vector<1x1x8x32xf32>,
    %40 = vector.extract_strided_slice %31 {offsets = [0, 0], sizes = [8, 8], strides = [1, 1]} : vector<8x32xf32> to vector<8x8xf32>
    %41 = vector.extract_strided_slice %31 {offsets = [0, 8], sizes = [8, 8], strides = [1, 1]} : vector<8x32xf32> to vector<8x8xf32>
    %42 = vector.extract_strided_slice %31 {offsets = [0, 16], sizes = [8, 8], strides = [1, 1]} : vector<8x32xf32> to vector<8x8xf32>
    %43 = vector.extract_strided_slice %31 {offsets = [0, 24], sizes = [8, 8], strides = [1, 1]} : vector<8x32xf32> to vector<8x8xf32>
    %cst_22 = arith.constant 0xFF800000 : f32
    %44 = vector.broadcast %cst_22 : f32 to vector<8x1xf32>
    %cst_23 = arith.constant 0xFF800000 : f32
    %45 = vector.broadcast %cst_23 : f32 to vector<8x1xf32>
    %cst_24 = arith.constant 0xFF800000 : f32
    %46 = vector.broadcast %cst_24 : f32 to vector<8x1xf32>
    %cst_25 = arith.constant 0xFF800000 : f32
    %47 = vector.broadcast %cst_25 : f32 to vector<8x1xf32>
    %cst_26 = arith.constant 0.000000e+00 : f32
    %48 = vector.broadcast %cst_26 : f32 to vector<8x1xf32>
    %cst_27 = arith.constant 0.000000e+00 : f32
    %49 = vector.broadcast %cst_27 : f32 to vector<8x1xf32>
    %cst_28 = arith.constant 0.000000e+00 : f32
    %50 = vector.broadcast %cst_28 : f32 to vector<8x1xf32>
    %cst_29 = arith.constant 0.000000e+00 : f32
    %51 = vector.broadcast %cst_29 : f32 to vector<8x1xf32>
    %cst_30 = arith.constant 0.000000e+00 : f32
    %52 = vector.broadcast %cst_30 : f32 to vector<8x8xf32>
    %cst_31 = arith.constant 0.000000e+00 : f32
    %53 = vector.broadcast %cst_31 : f32 to vector<8x8xf32>
    %cst_32 = arith.constant 0.000000e+00 : f32
    %54 = vector.broadcast %cst_32 : f32 to vector<8x8xf32>
    %cst_33 = arith.constant 0.000000e+00 : f32
    %55 = vector.broadcast %cst_33 : f32 to vector<8x8xf32>
    %56 = tpu.iota {dimensions = array<i32: 0>} : vector<8x8xi32>
    %c0_i32 = arith.constant 0 : i32
    %57 = vector.broadcast %c0_i32 : i32 to vector<8x8xi32>
    %58 = arith.addi %56, %57 : vector<8x8xi32>
    %59 = tpu.iota {dimensions = array<i32: 1>} : vector<8x8xi32>
    %c0_i32_34 = arith.constant 0 : i32
    %60 = vector.broadcast %c0_i32_34 : i32 to vector<8x8xi32>
    %61 = arith.addi %59, %60 : vector<8x8xi32>
    %62 = arith.cmpi sge, %58, %61 : vector<8x8xi32>
    %63 = vector.extract_strided_slice %32 {offsets = [0, 0], sizes = [8, 8], strides = [1, 1]} : vector<8x32xf32> to vector<8x8xf32>
    %64 = vector.extract_strided_slice %33 {offsets = [0, 0], sizes = [8, 8], strides = [1, 1]} : vector<8x32xf32> to vector<8x8xf32>
    %cst_35 = arith.constant dense<0.000000e+00> : vector<8x8xf32>
    %65 = tpu.matmul %40, %63, %cst_35 {dimension_numbers = #tpu.dot_dimension_numbers<[1], [1], [0], [0], [0, 0, 1, 0], [], []>} : vector<8x8xf32>, vector<8x8xf32>, vector<8x8xf32> -> vector<8x8xf32>
    %cst_36 = arith.constant -1.000000e+10 : f32
    %66 = vector.broadcast %cst_36 : f32 to vector<8x8xf32>
    %67 = arith.select %62, %65, %66 : vector<8x8xi1>, vector<8x8xf32>
    %cst_37 = arith.constant dense<0xFF800000> : vector<8xf32>
    %68 = vector.multi_reduction <maximumf>, %67, %cst_37 [1] : vector<8x8xf32> to vector<8xf32>
    %69 = vector.shape_cast %68 : vector<8xf32> to vector<8x1xf32>
    %70 = arith.maximumf %44, %69 : vector<8x1xf32>
    %71 = arith.subf %44, %70 : vector<8x1xf32>
    %72 = math.exp %71 : vector<8x1xf32>
    %73 = vector.broadcast %70 : vector<8x1xf32> to vector<8x8xf32>
    %74 = arith.subf %67, %73 : vector<8x8xf32>
    %75 = math.exp %74 : vector<8x8xf32>
    %76 = arith.mulf %72, %48 : vector<8x1xf32>
    %cst_38 = arith.constant dense<0.000000e+00> : vector<8xf32>
    %77 = vector.multi_reduction <add>, %75, %cst_38 [1] : vector<8x8xf32> to vector<8xf32>
    %78 = vector.shape_cast %77 : vector<8xf32> to vector<8x1xf32>
    %79 = arith.addf %76, %78 : vector<8x1xf32>
    %80 = vector.broadcast %72 : vector<8x1xf32> to vector<8x8xf32>
    %81 = arith.mulf %80, %52 : vector<8x8xf32>
    %cst_39 = arith.constant dense<0.000000e+00> : vector<8x8xf32>
    %82 = tpu.matmul %75, %64, %cst_39 {dimension_numbers = #tpu.dot_dimension_numbers<[1], [0], [0], [1], [0, 0, 1, 1], [], []>} : vector<8x8xf32>, vector<8x8xf32>, vector<8x8xf32> -> vector<8x8xf32>
    %83 = arith.addf %81, %82 : vector<8x8xf32>
    %84 = vector.extract_strided_slice %32 {offsets = [0, 8], sizes = [8, 8], strides = [1, 1]} : vector<8x32xf32> to vector<8x8xf32>
    %85 = vector.extract_strided_slice %33 {offsets = [0, 8], sizes = [8, 8], strides = [1, 1]} : vector<8x32xf32> to vector<8x8xf32>
    %cst_40 = arith.constant dense<0.000000e+00> : vector<8x8xf32>
    %86 = tpu.matmul %41, %84, %cst_40 {dimension_numbers = #tpu.dot_dimension_numbers<[1], [1], [0], [0], [0, 0, 1, 0], [], []>} : vector<8x8xf32>, vector<8x8xf32>, vector<8x8xf32> -> vector<8x8xf32>
    %cst_41 = arith.constant -1.000000e+10 : f32
    %87 = vector.broadcast %cst_41 : f32 to vector<8x8xf32>
    %88 = arith.select %62, %86, %87 : vector<8x8xi1>, vector<8x8xf32>
    %cst_42 = arith.constant dense<0xFF800000> : vector<8xf32>
    %89 = vector.multi_reduction <maximumf>, %88, %cst_42 [1] : vector<8x8xf32> to vector<8xf32>
    %90 = vector.shape_cast %89 : vector<8xf32> to vector<8x1xf32>
    %91 = arith.maximumf %45, %90 : vector<8x1xf32>
    %92 = arith.subf %45, %91 : vector<8x1xf32>
    %93 = math.exp %92 : vector<8x1xf32>
    %94 = vector.broadcast %91 : vector<8x1xf32> to vector<8x8xf32>
    %95 = arith.subf %88, %94 : vector<8x8xf32>
    %96 = math.exp %95 : vector<8x8xf32>
    %97 = arith.mulf %93, %49 : vector<8x1xf32>
    %cst_43 = arith.constant dense<0.000000e+00> : vector<8xf32>
    %98 = vector.multi_reduction <add>, %96, %cst_43 [1] : vector<8x8xf32> to vector<8xf32>
    %99 = vector.shape_cast %98 : vector<8xf32> to vector<8x1xf32>
    %100 = arith.addf %97, %99 : vector<8x1xf32>
    %101 = vector.broadcast %93 : vector<8x1xf32> to vector<8x8xf32>
    %102 = arith.mulf %101, %53 : vector<8x8xf32>
    %cst_44 = arith.constant dense<0.000000e+00> : vector<8x8xf32>
    %103 = tpu.matmul %96, %85, %cst_44 {dimension_numbers = #tpu.dot_dimension_numbers<[1], [0], [0], [1], [0, 0, 1, 1], [], []>} : vector<8x8xf32>, vector<8x8xf32>, vector<8x8xf32> -> vector<8x8xf32>
    %104 = arith.addf %102, %103 : vector<8x8xf32>
    %105 = vector.extract_strided_slice %32 {offsets = [0, 16], sizes = [8, 8], strides = [1, 1]} : vector<8x32xf32> to vector<8x8xf32>
    %106 = vector.extract_strided_slice %33 {offsets = [0, 16], sizes = [8, 8], strides = [1, 1]} : vector<8x32xf32> to vector<8x8xf32>
    %cst_45 = arith.constant dense<0.000000e+00> : vector<8x8xf32>
    %107 = tpu.matmul %42, %105, %cst_45 {dimension_numbers = #tpu.dot_dimension_numbers<[1], [1], [0], [0], [0, 0, 1, 0], [], []>} : vector<8x8xf32>, vector<8x8xf32>, vector<8x8xf32> -> vector<8x8xf32>
    %cst_46 = arith.constant -1.000000e+10 : f32
    %108 = vector.broadcast %cst_46 : f32 to vector<8x8xf32>
    %109 = arith.select %62, %107, %108 : vector<8x8xi1>, vector<8x8xf32>
    %cst_47 = arith.constant dense<0xFF800000> : vector<8xf32>
    %110 = vector.multi_reduction <maximumf>, %109, %cst_47 [1] : vector<8x8xf32> to vector<8xf32>
    %111 = vector.shape_cast %110 : vector<8xf32> to vector<8x1xf32>
    %112 = arith.maximumf %46, %111 : vector<8x1xf32>
    %113 = arith.subf %46, %112 : vector<8x1xf32>
    %114 = math.exp %113 : vector<8x1xf32>
    %115 = vector.broadcast %112 : vector<8x1xf32> to vector<8x8xf32>
    %116 = arith.subf %109, %115 : vector<8x8xf32>
    %117 = math.exp %116 : vector<8x8xf32>
    %118 = arith.mulf %114, %50 : vector<8x1xf32>
    %cst_48 = arith.constant dense<0.000000e+00> : vector<8xf32>
    %119 = vector.multi_reduction <add>, %117, %cst_48 [1] : vector<8x8xf32> to vector<8xf32>
    %120 = vector.shape_cast %119 : vector<8xf32> to vector<8x1xf32>
    %121 = arith.addf %118, %120 : vector<8x1xf32>
    %122 = vector.broadcast %114 : vector<8x1xf32> to vector<8x8xf32>
    %123 = arith.mulf %122, %54 : vector<8x8xf32>
    %cst_49 = arith.constant dense<0.000000e+00> : vector<8x8xf32>
    %124 = tpu.matmul %117, %106, %cst_49 {dimension_numbers = #tpu.dot_dimension_numbers<[1], [0], [0], [1], [0, 0, 1, 1], [], []>} : vector<8x8xf32>, vector<8x8xf32>, vector<8x8xf32> -> vector<8x8xf32>
    %125 = arith.addf %123, %124 : vector<8x8xf32>
    %126 = vector.extract_strided_slice %32 {offsets = [0, 24], sizes = [8, 8], strides = [1, 1]} : vector<8x32xf32> to vector<8x8xf32>
    %127 = vector.extract_strided_slice %33 {offsets = [0, 24], sizes = [8, 8], strides = [1, 1]} : vector<8x32xf32> to vector<8x8xf32>
    %cst_50 = arith.constant dense<0.000000e+00> : vector<8x8xf32>
    %128 = tpu.matmul %43, %126, %cst_50 {dimension_numbers = #tpu.dot_dimension_numbers<[1], [1], [0], [0], [0, 0, 1, 0], [], []>} : vector<8x8xf32>, vector<8x8xf32>, vector<8x8xf32> -> vector<8x8xf32>
    %cst_51 = arith.constant -1.000000e+10 : f32
    %129 = vector.broadcast %cst_51 : f32 to vector<8x8xf32>
    %130 = arith.select %62, %128, %129 : vector<8x8xi1>, vector<8x8xf32>
    %cst_52 = arith.constant dense<0xFF800000> : vector<8xf32>
    %131 = vector.multi_reduction <maximumf>, %130, %cst_52 [1] : vector<8x8xf32> to vector<8xf32>
    %132 = vector.shape_cast %131 : vector<8xf32> to vector<8x1xf32>
    %133 = arith.maximumf %47, %132 : vector<8x1xf32>
    %134 = arith.subf %47, %133 : vector<8x1xf32>
    %135 = math.exp %134 : vector<8x1xf32>
    %136 = vector.broadcast %133 : vector<8x1xf32> to vector<8x8xf32>
    %137 = arith.subf %130, %136 : vector<8x8xf32>
    %138 = math.exp %137 : vector<8x8xf32>
    %139 = arith.mulf %135, %51 : vector<8x1xf32>
    %cst_53 = arith.constant dense<0.000000e+00> : vector<8xf32>
    %140 = vector.multi_reduction <add>, %138, %cst_53 [1] : vector<8x8xf32> to vector<8xf32>
    %141 = vector.shape_cast %140 : vector<8xf32> to vector<8x1xf32>
    %142 = arith.addf %139, %141 : vector<8x1xf32>
    %143 = vector.broadcast %135 : vector<8x1xf32> to vector<8x8xf32>
    %144 = arith.mulf %143, %55 : vector<8x8xf32>
    %cst_54 = arith.constant dense<0.000000e+00> : vector<8x8xf32>
    %145 = tpu.matmul %138, %127, %cst_54 {dimension_numbers = #tpu.dot_dimension_numbers<[1], [0], [0], [1], [0, 0, 1, 1], [], []>} : vector<8x8xf32>, vector<8x8xf32>, vector<8x8xf32> -> vector<8x8xf32>
    %146 = arith.addf %144, %145 : vector<8x8xf32>
    %147 = tpu.reciprocal %79 {approx = true} : vector<8x1xf32> -> vector<8x1xf32>
    %148 = vector.broadcast %147 : vector<8x1xf32> to vector<8x8xf32>
    %149 = arith.mulf %83, %148 : vector<8x8xf32>
    %150 = tpu.reciprocal %100 {approx = true} : vector<8x1xf32> -> vector<8x1xf32>
    %151 = vector.broadcast %150 : vector<8x1xf32> to vector<8x8xf32>
    %152 = arith.mulf %104, %151 : vector<8x8xf32>
    %153 = tpu.reciprocal %121 {approx = true} : vector<8x1xf32> -> vector<8x1xf32>
    %154 = vector.broadcast %153 : vector<8x1xf32> to vector<8x8xf32>
    %155 = arith.mulf %125, %154 : vector<8x8xf32>
    %156 = tpu.reciprocal %142 {approx = true} : vector<8x1xf32> -> vector<8x1xf32>
    %157 = vector.broadcast %156 : vector<8x1xf32> to vector<8x8xf32>
    %158 = arith.mulf %146, %157 : vector<8x8xf32>
    %159 = tpu.concatenate %149, %152, %155, %158 in 1 : vector<8x8xf32>, vector<8x8xf32>, vector<8x8xf32>, vector<8x8xf32> -> vector<8x32xf32>
    %c0_55 = arith.constant 0 : index
    %c0_56 = arith.constant 0 : index
    %160 = vector.load %arg6[%c0_55, %c0_56] : memref<32x32xf32, #tpu.memory_space<vmem>>, vector<32x32xf32>
    %cst_57 = arith.constant dense<0.000000e+00> : vector<8x32xf32>
    %161 = tpu.matmul %159, %160, %cst_57 {dimension_numbers = #tpu.dot_dimension_numbers<[1], [0], [0], [1], [0, 0, 1, 1], [], []>} : vector<8x32xf32>, vector<32x32xf32>, vector<8x32xf32> -> vector<8x32xf32>
    %c0_58 = arith.constant 0 : index
    %c0_59 = arith.constant 0 : index
    %162 = vector.load %arg7[%c0_58, %c0_59] : memref<1x32xf32, #tpu.memory_space<vmem>>, vector<1x32xf32>
    %163 = vector.broadcast %162 : vector<1x32xf32> to vector<8x32xf32>
    %164 = arith.addf %161, %163 : vector<8x32xf32>
    %165 = arith.addf %1, %164 : vector<8x32xf32>
    %c0_60 = arith.constant 0 : index
    %c0_61 = arith.constant 0 : index
    %166 = vector.load %arg8[%c0_60, %c0_61] : memref<1x32xf32, #tpu.memory_space<vmem>>, vector<1x32xf32>
    %c0_62 = arith.constant 0 : index
    %c0_63 = arith.constant 0 : index
    %167 = vector.load %arg9[%c0_62, %c0_63] : memref<1x32xf32, #tpu.memory_space<vmem>>, vector<1x32xf32>
    %cst_64 = arith.constant dense<0.000000e+00> : vector<8xf32>
    %168 = vector.multi_reduction <add>, %165, %cst_64 [1] : vector<8x32xf32> to vector<8xf32>
    %169 = vector.shape_cast %168 : vector<8xf32> to vector<8x1xf32>
    %cst_65 = arith.constant 3.200000e+01 : f32
    %170 = vector.broadcast %cst_65 : f32 to vector<8x1xf32>
    %171 = arith.divf %169, %170 : vector<8x1xf32>
    %172 = vector.broadcast %171 : vector<8x1xf32> to vector<8x32xf32>
    %173 = arith.subf %165, %172 : vector<8x32xf32>
    %174 = arith.mulf %173, %173 : vector<8x32xf32>
    %cst_66 = arith.constant dense<0.000000e+00> : vector<8xf32>
    %175 = vector.multi_reduction <add>, %174, %cst_66 [1] : vector<8x32xf32> to vector<8xf32>
    %176 = vector.shape_cast %175 : vector<8xf32> to vector<8x1xf32>
    %cst_67 = arith.constant 3.200000e+01 : f32
    %177 = vector.broadcast %cst_67 : f32 to vector<8x1xf32>
    %178 = arith.divf %176, %177 : vector<8x1xf32>
    %179 = vector.broadcast %171 : vector<8x1xf32> to vector<8x32xf32>
    %180 = arith.subf %165, %179 : vector<8x32xf32>
    %cst_68 = arith.constant 9.99999974E-6 : f32
    %181 = vector.broadcast %cst_68 : f32 to vector<8x1xf32>
    %182 = arith.addf %178, %181 : vector<8x1xf32>
    %183 = math.sqrt %182 : vector<8x1xf32>
    %184 = vector.broadcast %183 : vector<8x1xf32> to vector<8x32xf32>
    %185 = arith.divf %180, %184 : vector<8x32xf32>
    %186 = vector.broadcast %166 : vector<1x32xf32> to vector<8x32xf32>
    %187 = arith.mulf %185, %186 : vector<8x32xf32>
    %188 = vector.broadcast %167 : vector<1x32xf32> to vector<8x32xf32>
    %189 = arith.addf %187, %188 : vector<8x32xf32>
    %c0_69 = arith.constant 0 : index
    %c0_70 = arith.constant 0 : index
    %190 = vector.load %arg10[%c0_69, %c0_70] : memref<32x128xf32, #tpu.memory_space<vmem>>, vector<32x128xf32>
    %cst_71 = arith.constant dense<0.000000e+00> : vector<8x128xf32>
    %191 = tpu.matmul %189, %190, %cst_71 {dimension_numbers = #tpu.dot_dimension_numbers<[1], [0], [0], [1], [0, 0, 1, 1], [], []>} : vector<8x32xf32>, vector<32x128xf32>, vector<8x128xf32> -> vector<8x128xf32>
    %c0_72 = arith.constant 0 : index
    %c0_73 = arith.constant 0 : index
    %192 = vector.load %arg11[%c0_72, %c0_73] : memref<1x128xf32, #tpu.memory_space<vmem>>, vector<1x128xf32>
    %193 = vector.broadcast %192 : vector<1x128xf32> to vector<8x128xf32>
    %194 = arith.addf %191, %193 : vector<8x128xf32>
    %cst_74 = arith.constant 5.000000e-01 : f32
    %195 = vector.broadcast %cst_74 : f32 to vector<8x128xf32>
    %196 = arith.mulf %195, %194 : vector<8x128xf32>
    %cst_75 = arith.constant 0.636619746 : f32
    %197 = math.sqrt %cst_75 : f32
    %cst_76 = arith.constant 4.471500e-02 : f32
    %198 = vector.broadcast %cst_76 : f32 to vector<8x128xf32>
    %199 = arith.mulf %198, %194 : vector<8x128xf32>
    %200 = arith.mulf %199, %194 : vector<8x128xf32>
    %201 = arith.mulf %200, %194 : vector<8x128xf32>
    %202 = arith.addf %194, %201 : vector<8x128xf32>
    %203 = vector.broadcast %197 : f32 to vector<8x128xf32>
    %204 = arith.mulf %203, %202 : vector<8x128xf32>
    %205 = math.tanh %204 : vector<8x128xf32>
    %cst_77 = arith.constant 1.000000e+00 : f32
    %206 = vector.broadcast %cst_77 : f32 to vector<8x128xf32>
    %207 = arith.addf %206, %205 : vector<8x128xf32>
    %208 = arith.mulf %196, %207 : vector<8x128xf32>
    %c0_78 = arith.constant 0 : index
    %c0_79 = arith.constant 0 : index
    %209 = vector.load %arg12[%c0_78, %c0_79] : memref<128x32xf32, #tpu.memory_space<vmem>>, vector<128x32xf32>
    %cst_80 = arith.constant dense<0.000000e+00> : vector<8x32xf32>
    %210 = tpu.matmul %208, %209, %cst_80 {dimension_numbers = #tpu.dot_dimension_numbers<[1], [0], [0], [1], [0, 0, 1, 1], [], []>} : vector<8x128xf32>, vector<128x32xf32>, vector<8x32xf32> -> vector<8x32xf32>
    %c0_81 = arith.constant 0 : index
    %c0_82 = arith.constant 0 : index
    %211 = vector.load %arg13[%c0_81, %c0_82] : memref<1x32xf32, #tpu.memory_space<vmem>>, vector<1x32xf32>
    %212 = vector.broadcast %211 : vector<1x32xf32> to vector<8x32xf32>
    %213 = arith.addf %210, %212 : vector<8x32xf32>
    %214 = arith.addf %165, %213 : vector<8x32xf32>
    %c0_83 = arith.constant 0 : index
    %c0_84 = arith.constant 0 : index
    %c0_85 = arith.constant 0 : index
    %215 = vector.load %arg14[%c0_83, %c0_84, %c0_85] : memref<1x8x32xf32, #tpu.memory_space<vmem>>, vector<1x8x32xf32>
    %216 = vector.shape_cast %215 : vector<1x8x32xf32> to vector<8x32xf32>
    %217 = vector.shape_cast %214 : vector<8x32xf32> to vector<1x8x32xf32>
    tpu.vector_store %arg14[%c0_83, %c0_84, %c0_85], %217 {strides = array<i32>} : memref<1x8x32xf32, #tpu.memory_space<vmem>>, vector<1x8x32xf32>,
    return
  }
  func.func @transform_0(%arg0: i32) -> (i32, i32, i32) {
    %c0_i32 = arith.constant 0 : i32
    %c0_i32_0 = arith.constant 0 : i32
    %c0_i32_1 = arith.constant 0 : i32
    return %arg0, %c0_i32, %c0_i32_0 : i32, i32, i32
  }
  func.func @transform_1(%arg0: i32) -> (i32, i32) {
    %c0_i32 = arith.constant 0 : i32
    %c0_i32_0 = arith.constant 0 : i32
    %c0_i32_1 = arith.constant 0 : i32
    return %c0_i32, %c0_i32_0 : i32, i32
  }
  func.func @transform_2(%arg0: i32) -> (i32, i32) {
    %c0_i32 = arith.constant 0 : i32
    %c0_i32_0 = arith.constant 0 : i32
    %c0_i32_1 = arith.constant 0 : i32
    return %c0_i32, %c0_i32_0 : i32, i32
  }
  func.func @transform_3(%arg0: i32) -> (i32, i32) {
    %c0_i32 = arith.constant 0 : i32
    %c0_i32_0 = arith.constant 0 : i32
    %c0_i32_1 = arith.constant 0 : i32
    return %c0_i32, %c0_i32_0 : i32, i32
  }
  func.func @transform_4(%arg0: i32) -> (i32, i32) {
    %c0_i32 = arith.constant 0 : i32
    %c0_i32_0 = arith.constant 0 : i32
    %c0_i32_1 = arith.constant 0 : i32
    return %c0_i32, %c0_i32_0 : i32, i32
  }
  func.func @transform_5(%arg0: i32) -> (i32, i32) {
    %c0_i32 = arith.constant 0 : i32
    %c0_i32_0 = arith.constant 0 : i32
    %c0_i32_1 = arith.constant 0 : i32
    return %c0_i32, %c0_i32_0 : i32, i32
  }
  func.func @transform_6(%arg0: i32) -> (i32, i32) {
    %c0_i32 = arith.constant 0 : i32
    %c0_i32_0 = arith.constant 0 : i32
    %c0_i32_1 = arith.constant 0 : i32
    return %c0_i32, %c0_i32_0 : i32, i32
  }
  func.func @transform_7(%arg0: i32) -> (i32, i32) {
    %c0_i32 = arith.constant 0 : i32
    %c0_i32_0 = arith.constant 0 : i32
    %c0_i32_1 = arith.constant 0 : i32
    return %c0_i32, %c0_i32_0 : i32, i32
  }
  func.func @transform_8(%arg0: i32) -> (i32, i32) {
    %c0_i32 = arith.constant 0 : i32
    %c0_i32_0 = arith.constant 0 : i32
    %c0_i32_1 = arith.constant 0 : i32
    return %c0_i32, %c0_i32_0 : i32, i32
  }
  func.func @transform_9(%arg0: i32) -> (i32, i32) {
    %c0_i32 = arith.constant 0 : i32
    %c0_i32_0 = arith.constant 0 : i32
    %c0_i32_1 = arith.constant 0 : i32
    return %c0_i32, %c0_i32_0 : i32, i32
  }
  func.func @transform_10(%arg0: i32) -> (i32, i32) {
    %c0_i32 = arith.constant 0 : i32
    %c0_i32_0 = arith.constant 0 : i32
    %c0_i32_1 = arith.constant 0 : i32
    return %c0_i32, %c0_i32_0 : i32, i32
  }
  func.func @transform_11(%arg0: i32) -> (i32, i32) {
    %c0_i32 = arith.constant 0 : i32
    %c0_i32_0 = arith.constant 0 : i32
    %c0_i32_1 = arith.constant 0 : i32
    return %c0_i32, %c0_i32_0 : i32, i32
  }
  func.func @transform_12(%arg0: i32) -> (i32, i32) {
    %c0_i32 = arith.constant 0 : i32
    %c0_i32_0 = arith.constant 0 : i32
    %c0_i32_1 = arith.constant 0 : i32
    return %c0_i32, %c0_i32_0 : i32, i32
  }
  func.func @transform_13(%arg0: i32) -> (i32, i32, i32) {
    %c0_i32 = arith.constant 0 : i32
    %c0_i32_0 = arith.constant 0 : i32
    %c0_i32_1 = arith.constant 0 : i32
    return %arg0, %c0_i32, %c0_i32_0 : i32, i32, i32
  }
  func.func @transform_14(%arg0: i32) -> (i32, i32, i32, i32) {
    %c0_i32 = arith.constant 0 : i32
    %c0_i32_0 = arith.constant 0 : i32
    %c0_i32_1 = arith.constant 0 : i32
    %c0_i32_2 = arith.constant 0 : i32
    return %c0_i32, %arg0, %c0_i32_0, %c0_i32_1 : i32, i32, i32, i32
  }
}

</mosaic_0001>

<llo_original>
// kernel: tpu_custom_call.1
$region0: #{tpu_custom_call.1}
  #allocation0 [shape = 'u32[]', space=smem, size = 0x4, offset = 0x4, fixed_abs, tag = 'smem constant byte address 0x4 - core index']
  #allocation1 [shape = 'u32[144,128]{1,0:T(1,128)}', space=vmem, size = 0x12000, scoped, tag = 'internal scratch']
  %s0 = inlined_call_operand.vmem [shape: f32[2,8,32], index: 0, kind: input, shape index: {}]
  %s1 = inlined_call_operand.vmem [shape: f32[1,32], index: 1, kind: input, shape index: {}]
  %s2 = inlined_call_operand.vmem [shape: f32[1,32], index: 2, kind: input, shape index: {}]
  %s3 = inlined_call_operand.vmem [shape: f32[32,96], index: 3, kind: input, shape index: {}]
  %s4 = inlined_call_operand.vmem [shape: f32[1,96], index: 4, kind: input, shape index: {}]
  %s5 = inlined_call_operand.vmem [shape: f32[32,32], index: 5, kind: input, shape index: {}]
  %s6 = inlined_call_operand.vmem [shape: f32[1,32], index: 6, kind: input, shape index: {}]
  %s7 = inlined_call_operand.vmem [shape: f32[1,32], index: 7, kind: input, shape index: {}]
  %s8 = inlined_call_operand.vmem [shape: f32[1,32], index: 8, kind: input, shape index: {}]
  %s9 = inlined_call_operand.vmem [shape: f32[32,128], index: 9, kind: input, shape index: {}]
  %s10 = inlined_call_operand.vmem [shape: f32[1,128], index: 10, kind: input, shape index: {}]
  %s11 = inlined_call_operand.vmem [shape: f32[128,32], index: 11, kind: input, shape index: {}]
  %s12 = inlined_call_operand.vmem [shape: f32[1,32], index: 12, kind: input, shape index: {}]
  %s13 = inlined_call_operand.hbm [shape: f32[2,8,32], index: 13, kind: output, shape index: {0}]
  %s14 = inlined_call_operand.hbm [shape: f32[2,2,8,32], index: 14, kind: output, shape index: {1}]
  %15 = xla_tuple %s13, %s14
  %s16 = sld [smem:[#allocation0]]
  $region93: #{tpu_custom_call.1} parent=0
    _
  %s18 = ssub.s32 1, %s16
  %s19 = scalar_select 0, %s18, %s16
  $region1: #{tpu_custom_call.1} parent=0
    #allocation2 [shape = 'u8[8192]{0}', space=vmem, size = 0x2000, scoped, tag = 'output window, operand 0']
    #allocation3 [shape = 's32[2]{0}', space=sflag, size = 0x8, scoped, tag = 'scoped memory for tpu_custom_call.1']
    #allocation4 [shape = 'u8[16384]{0}', space=vmem, size = 0x4000, scoped, tag = 'output window, operand 1']
    #allocation5 [shape = 's32[2]{0}', space=sflag, size = 0x8, scoped, tag = 'scoped memory for tpu_custom_call.1']
    %20 = vsyncpa [#allocation3], 0
    %s21 = scalar_lea.sflag [#allocation3], 1
    %22 = vsyncpa %s21, 0
    %23 = vsyncpa [#allocation5], 0
    %s24 = scalar_lea.sflag [#allocation5], 1
    %25 = vsyncpa %s24, 0
    loop: start=0, step=1, limit=4
    $region2: #{tpu_custom_call.1} parent=1 // loop_pre_header
      _
    $region3: #{tpu_custom_call.1} parent=1 // loop_header
      %s27 = sphi 0, %s31
      %p28 = scmp.ge.s32.totalorder %s27, 4
      %s37 = sphi 0, %s39
      %s40 = sphi 0, %s37
      %s41 = sphi 0, %s40
      %s57 = sphi 0, %s41
      %s61 = sphi 0, %s61
      %s63 = sphi 0, %s61
      %s64 = sphi 0, %s63
      %s78 = sphi 0, %s64
      %s82 = sphi 0, %s82
      %s84 = sphi 0, %s82
      %s85 = sphi 0, %s84
      %s99 = sphi 0, %s85
      %s103 = sphi 0, %s103
      %s105 = sphi 0, %s103
      %s106 = sphi 0, %s105
      %s120 = sphi 0, %s106
      %s124 = sphi 0, %s124
      %s126 = sphi 0, %s124
      %s127 = sphi 0, %s126
      %s141 = sphi 0, %s127
      %s145 = sphi 0, %s145
      %s147 = sphi 0, %s145
      %s148 = sphi 0, %s147
      %s162 = sphi 0, %s148
      %s166 = sphi 0, %s166
      %s168 = sphi 0, %s166
      %s169 = sphi 0, %s168
      %s183 = sphi 0, %s169
      %s187 = sphi 0, %s187
      %s189 = sphi 0, %s187
      %s190 = sphi 0, %s189
      %s204 = sphi 0, %s190
      %s208 = sphi 0, %s208
      %s210 = sphi 0, %s208
      %s211 = sphi 0, %s210
      %s225 = sphi 0, %s211
      %s229 = sphi 0, %s229
      %s231 = sphi 0, %s229
      %s232 = sphi 0, %s231
      %s246 = sphi 0, %s232
      %s250 = sphi 0, %s250
      %s252 = sphi 0, %s250
      %s253 = sphi 0, %s252
      %s267 = sphi 0, %s253
      %s271 = sphi 0, %s271
      %s273 = sphi 0, %s271
      %s274 = sphi 0, %s273
      %s288 = sphi 0, %s274
      %s292 = sphi 0, %s292
      %s294 = sphi 0, %s292
      %s295 = sphi 0, %s294
      %s309 = sphi 0, %s295
      %s315 = sphi 0, %s317
      %s318 = sphi 0, %s315
      %s319 = sphi 0, %s318
      %s335 = sphi 0, %s319
      %s341 = sphi 0, %s343
      %s344 = sphi 0, %s341
      %s345 = sphi 0, %s344
      %s361 = sphi 0, %s345
    $region4: #{tpu_custom_call.1} parent=1 // loop_header_branch
      %30 = sbr.rel (%p28) target = $region8
    $region5: #{tpu_custom_call.1} parent=1 // loop_body
      %s32 = ssub.s32 %s27, 1
      %s33 = ssub.s32 %s27, 2
      %s34 = sadd.s32 %s27, 1
      %s35 = ssub.s32 %s27, %s34
      %p36 = scmp.eq.s32.totalorder %s35, 0
      %s38 = sadd.s32 %s37, 1
      %s39 = scalar_select %p36, %s37, %s38
      %p42 = pneg %p36
      %p43 = scmp.eq.s32.totalorder %s27, 1
      %p44 = por %p42, %p43
      %p45 = scmp.ne.s32.totalorder %s37, %s40
      %p46 = scmp.eq.s32.totalorder %s27, 0
      %p47 = por %p45, %p46
      %p48 = scmp.ne.s32.totalorder %s37, %s40
      %p49 = scmp.eq.s32.totalorder %s32, 1
      %p50 = por %p48, %p49
      %p51 = scmp.ne.s32.totalorder %s40, %s41
      %p52 = scmp.eq.s32.totalorder %s32, 0
      %p53 = por %p51, %p52
      %p54 = scmp.ne.s32.totalorder %s40, %s41
      %p55 = scmp.eq.s32.totalorder %s33, 1
      %p56 = por %p54, %p55
      %p58 = scmp.ne.s32.totalorder %s41, %s57
      %p59 = scmp.eq.s32.totalorder %s33, 0
      %p60 = por %p58, %p59
      %s62 = sadd.s32 %s61, 1
      %p65 = scmp.eq.s32.totalorder %s27, 1
      %p66 = scmp.ne.s32.totalorder %s61, %s63
      %p67 = scmp.eq.s32.totalorder %s27, 0
      %p68 = por %p66, %p67
      %p69 = scmp.ne.s32.totalorder %s61, %s63
      %p70 = scmp.eq.s32.totalorder %s32, 1
      %p71 = por %p69, %p70
      %p72 = scmp.ne.s32.totalorder %s63, %s64
      %p73 = scmp.eq.s32.totalorder %s32, 0
      %p74 = por %p72, %p73
      %p75 = scmp.ne.s32.totalorder %s63, %s64
      %p76 = scmp.eq.s32.totalorder %s33, 1
      %p77 = por %p75, %p76
      %p79 = scmp.ne.s32.totalorder %s64, %s78
      %p80 = scmp.eq.s32.totalorder %s33, 0
      %p81 = por %p79, %p80
      %s83 = sadd.s32 %s82, 1
      %p86 = scmp.eq.s32.totalorder %s27, 1
      %p87 = scmp.ne.s32.totalorder %s82, %s84
      %p88 = scmp.eq.s32.totalorder %s27, 0
      %p89 = por %p87, %p88
      %p90 = scmp.ne.s32.totalorder %s82, %s84
      %p91 = scmp.eq.s32.totalorder %s32, 1
      %p92 = por %p90, %p91
      %p93 = scmp.ne.s32.totalorder %s84, %s85
      %p94 = scmp.eq.s32.totalorder %s32, 0
      %p95 = por %p93, %p94
      %p96 = scmp.ne.s32.totalorder %s84, %s85
      %p97 = scmp.eq.s32.totalorder %s33, 1
      %p98 = por %p96, %p97
      %p100 = scmp.ne.s32.totalorder %s85, %s99
      %p101 = scmp.eq.s32.totalorder %s33, 0
      %p102 = por %p100, %p101
      %s104 = sadd.s32 %s103, 1
      %p107 = scmp.eq.s32.totalorder %s27, 1
      %p108 = scmp.ne.s32.totalorder %s103, %s105
      %p109 = scmp.eq.s32.totalorder %s27, 0
      %p110 = por %p108, %p109
      %p111 = scmp.ne.s32.totalorder %s103, %s105
      %p112 = scmp.eq.s32.totalorder %s32, 1
      %p113 = por %p111, %p112
      %p114 = scmp.ne.s32.totalorder %s105, %s106
      %p115 = scmp.eq.s32.totalorder %s32, 0
      %p116 = por %p114, %p115
      %p117 = scmp.ne.s32.totalorder %s105, %s106
      %p118 = scmp.eq.s32.totalorder %s33, 1
      %p119 = por %p117, %p118
      %p121 = scmp.ne.s32.totalorder %s106, %s120
      %p122 = scmp.eq.s32.totalorder %s33, 0
      %p123 = por %p121, %p122
      %s125 = sadd.s32 %s124, 1
      %p128 = scmp.eq.s32.totalorder %s27, 1
      %p129 = scmp.ne.s32.totalorder %s124, %s126
      %p130 = scmp.eq.s32.totalorder %s27, 0
      %p131 = por %p129, %p130
      %p132 = scmp.ne.s32.totalorder %s124, %s126
      %p133 = scmp.eq.s32.totalorder %s32, 1
      %p134 = por %p132, %p133
      %p135 = scmp.ne.s32.totalorder %s126, %s127
      %p136 = scmp.eq.s32.totalorder %s32, 0
      %p137 = por %p135, %p136
      %p138 = scmp.ne.s32.totalorder %s126, %s127
      %p139 = scmp.eq.s32.totalorder %s33, 1
      %p140 = por %p138, %p139
      %p142 = scmp.ne.s32.totalorder %s127, %s141
      %p143 = scmp.eq.s32.totalorder %s33, 0
      %p144 = por %p142, %p143
      %s146 = sadd.s32 %s145, 1
      %p149 = scmp.eq.s32.totalorder %s27, 1
      %p150 = scmp.ne.s32.totalorder %s145, %s147
      %p151 = scmp.eq.s32.totalorder %s27, 0
      %p152 = por %p150, %p151
      %p153 = scmp.ne.s32.totalorder %s145, %s147
      %p154 = scmp.eq.s32.totalorder %s32, 1
      %p155 = por %p153, %p154
      %p156 = scmp.ne.s32.totalorder %s147, %s148
      %p157 = scmp.eq.s32.totalorder %s32, 0
      %p158 = por %p156, %p157
      %p159 = scmp.ne.s32.totalorder %s147, %s148
      %p160 = scmp.eq.s32.totalorder %s33, 1
      %p161 = por %p159, %p160
      %p163 = scmp.ne.s32.totalorder %s148, %s162
      %p164 = scmp.eq.s32.totalorder %s33, 0
      %p165 = por %p163, %p164
      %s167 = sadd.s32 %s166, 1
      %p170 = scmp.eq.s32.totalorder %s27, 1
      %p171 = scmp.ne.s32.totalorder %s166, %s168
      %p172 = scmp.eq.s32.totalorder %s27, 0
      %p173 = por %p171, %p172
      %p174 = scmp.ne.s32.totalorder %s166, %s168
      %p175 = scmp.eq.s32.totalorder %s32, 1
      %p176 = por %p174, %p175
      %p177 = scmp.ne.s32.totalorder %s168, %s169
      %p178 = scmp.eq.s32.totalorder %s32, 0
      %p179 = por %p177, %p178
      %p180 = scmp.ne.s32.totalorder %s168, %s169
      %p181 = scmp.eq.s32.totalorder %s33, 1
      %p182 = por %p180, %p181
      %p184 = scmp.ne.s32.totalorder %s169, %s183
      %p185 = scmp.eq.s32.totalorder %s33, 0
      %p186 = por %p184, %p185
      %s188 = sadd.s32 %s187, 1
      %p191 = scmp.eq.s32.totalorder %s27, 1
      %p192 = scmp.ne.s32.totalorder %s187, %s189
      %p193 = scmp.eq.s32.totalorder %s27, 0
      %p194 = por %p192, %p193
      %p195 = scmp.ne.s32.totalorder %s187, %s189
      %p196 = scmp.eq.s32.totalorder %s32, 1
      %p197 = por %p195, %p196
      %p198 = scmp.ne.s32.totalorder %s189, %s190
      %p199 = scmp.eq.s32.totalorder %s32, 0
      %p200 = por %p198, %p199
      %p201 = scmp.ne.s32.totalorder %s189, %s190
      %p202 = scmp.eq.s32.totalorder %s33, 1
      %p203 = por %p201, %p202
      %p205 = scmp.ne.s32.totalorder %s190, %s204
      %p206 = scmp.eq.s32.totalorder %s33, 0
      %p207 = por %p205, %p206
      %s209 = sadd.s32 %s208, 1
      %p212 = scmp.eq.s32.totalorder %s27, 1
      %p213 = scmp.ne.s32.totalorder %s208, %s210
      %p214 = scmp.eq.s32.totalorder %s27, 0
      %p215 = por %p213, %p214
      %p216 = scmp.ne.s32.totalorder %s208, %s210
      %p217 = scmp.eq.s32.totalorder %s32, 1
      %p218 = por %p216, %p217
      %p219 = scmp.ne.s32.totalorder %s210, %s211
      %p220 = scmp.eq.s32.totalorder %s32, 0
      %p221 = por %p219, %p220
      %p222 = scmp.ne.s32.totalorder %s210, %s211
      %p223 = scmp.eq.s32.totalorder %s33, 1
      %p224 = por %p222, %p223
      %p226 = scmp.ne.s32.totalorder %s211, %s225
      %p227 = scmp.eq.s32.totalorder %s33, 0
      %p228 = por %p226, %p227
      %s230 = sadd.s32 %s229, 1
      %p233 = scmp.eq.s32.totalorder %s27, 1
      %p234 = scmp.ne.s32.totalorder %s229, %s231
      %p235 = scmp.eq.s32.totalorder %s27, 0
      %p236 = por %p234, %p235
      %p237 = scmp.ne.s32.totalorder %s229, %s231
      %p238 = scmp.eq.s32.totalorder %s32, 1
      %p239 = por %p237, %p238
      %p240 = scmp.ne.s32.totalorder %s231, %s232
      %p241 = scmp.eq.s32.totalorder %s32, 0
      %p242 = por %p240, %p241
      %p243 = scmp.ne.s32.totalorder %s231, %s232
      %p244 = scmp.eq.s32.totalorder %s33, 1
      %p245 = por %p243, %p244
      %p247 = scmp.ne.s32.totalorder %s232, %s246
      %p248 = scmp.eq.s32.totalorder %s33, 0
      %p249 = por %p247, %p248
      %s251 = sadd.s32 %s250, 1
      %p254 = scmp.eq.s32.totalorder %s27, 1
      %p255 = scmp.ne.s32.totalorder %s250, %s252
      %p256 = scmp.eq.s32.totalorder %s27, 0
      %p257 = por %p255, %p256
      %p258 = scmp.ne.s32.totalorder %s250, %s252
      %p259 = scmp.eq.s32.totalorder %s32, 1
      %p260 = por %p258, %p259
      %p261 = scmp.ne.s32.totalorder %s252, %s253
      %p262 = scmp.eq.s32.totalorder %s32, 0
      %p263 = por %p261, %p262
      %p264 = scmp.ne.s32.totalorder %s252, %s253
      %p265 = scmp.eq.s32.totalorder %s33, 1
      %p266 = por %p264, %p265
      %p268 = scmp.ne.s32.totalorder %s253, %s267
      %p269 = scmp.eq.s32.totalorder %s33, 0
      %p270 = por %p268, %p269
      %s272 = sadd.s32 %s271, 1
      %p275 = scmp.eq.s32.totalorder %s27, 1
      %p276 = scmp.ne.s32.totalorder %s271, %s273
      %p277 = scmp.eq.s32.totalorder %s27, 0
      %p278 = por %p276, %p277
      %p279 = scmp.ne.s32.totalorder %s271, %s273
      %p280 = scmp.eq.s32.totalorder %s32, 1
      %p281 = por %p279, %p280
      %p282 = scmp.ne.s32.totalorder %s273, %s274
      %p283 = scmp.eq.s32.totalorder %s32, 0
      %p284 = por %p282, %p283
      %p285 = scmp.ne.s32.totalorder %s273, %s274
      %p286 = scmp.eq.s32.totalorder %s33, 1
      %p287 = por %p285, %p286
      %p289 = scmp.ne.s32.totalorder %s274, %s288
      %p290 = scmp.eq.s32.totalorder %s33, 0
      %p291 = por %p289, %p290
      %s293 = sadd.s32 %s292, 1
      %p296 = scmp.eq.s32.totalorder %s27, 1
      %p297 = scmp.ne.s32.totalorder %s292, %s294
      %p298 = scmp.eq.s32.totalorder %s27, 0
      %p299 = por %p297, %p298
      %p300 = scmp.ne.s32.totalorder %s292, %s294
      %p301 = scmp.eq.s32.totalorder %s32, 1
      %p302 = por %p300, %p301
      %p303 = scmp.ne.s32.totalorder %s294, %s295
      %p304 = scmp.eq.s32.totalorder %s32, 0
      %p305 = por %p303, %p304
      %p306 = scmp.ne.s32.totalorder %s294, %s295
      %p307 = scmp.eq.s32.totalorder %s33, 1
      %p308 = por %p306, %p307
      %p310 = scmp.ne.s32.totalorder %s295, %s309
      %p311 = scmp.eq.s32.totalorder %s33, 0
      %p312 = por %p310, %p311
      %s313 = ssub.s32 %s27, %s34
      %p314 = scmp.eq.s32.totalorder %s313, 0
      %s316 = sadd.s32 %s315, 1
      %s317 = scalar_select %p314, %s315, %s316
      %p320 = pneg %p314
      %p321 = scmp.eq.s32.totalorder %s27, 1
      %p322 = por %p320, %p321
      %p323 = scmp.ne.s32.totalorder %s315, %s318
      %p324 = scmp.eq.s32.totalorder %s27, 0
      %p325 = por %p323, %p324
      %p326 = scmp.ne.s32.totalorder %s315, %s318
      %p327 = scmp.eq.s32.totalorder %s32, 1
      %p328 = por %p326, %p327
      %p329 = scmp.ne.s32.totalorder %s318, %s319
      %p330 = scmp.eq.s32.totalorder %s32, 0
      %p331 = por %p329, %p330
      %p332 = scmp.ne.s32.totalorder %s318, %s319
      %p333 = scmp.eq.s32.totalorder %s33, 1
      %p334 = por %p332, %p333
      %p336 = scmp.ne.s32.totalorder %s319, %s335
      %p337 = scmp.eq.s32.totalorder %s33, 0
      %p338 = por %p336, %p337
      %s339 = ssub.s32 %s27, %s34
      %p340 = scmp.eq.s32.totalorder %s339, 0
      %s342 = sadd.s32 %s341, 1
      %s343 = scalar_select %p340, %s341, %s342
      %p346 = pneg %p340
      %p347 = scmp.eq.s32.totalorder %s27, 1
      %p348 = por %p346, %p347
      %p349 = scmp.ne.s32.totalorder %s341, %s344
      %p350 = scmp.eq.s32.totalorder %s27, 0
      %p351 = por %p349, %p350
      %p352 = scmp.ne.s32.totalorder %s341, %s344
      %p353 = scmp.eq.s32.totalorder %s32, 1
      %p354 = por %p352, %p353
      %p355 = scmp.ne.s32.totalorder %s344, %s345
      %p356 = scmp.eq.s32.totalorder %s32, 0
      %p357 = por %p355, %p356
      %p358 = scmp.ne.s32.totalorder %s344, %s345
      %p359 = scmp.eq.s32.totalorder %s33, 1
      %p360 = por %p358, %p359
      %p362 = scmp.ne.s32.totalorder %s345, %s361
      %p363 = scmp.eq.s32.totalorder %s33, 0
      %p364 = por %p362, %p363
      %p365 = scmp.le.s32.totalorder 1, %s27
      %p366 = scmp.lt.s32.totalorder %s27, 3
      %p367 = pnand %p365, %p366
      %p368 = pneg %p367
      // Predicated region
      $region9: #{tpu_custom_call.1} parent=5 // pred_check
        _
      $region10: #{tpu_custom_call.1} parent=5 // pred_check_branch
        %370 = sbr.rel (%p367) target = $region12
      $region11: #{tpu_custom_call.1} parent=5 // pred_region
        %s371 = ssub.s32 %s27, 1
        // Predicated region
        $region13: #{tpu_custom_call.1} parent=11 // pred_check
          %p372 = pneg %p74
        $region14: #{tpu_custom_call.1} parent=11 // pred_check_branch
          %374 = sbr.rel (%p372) target = $region16
        $region15: #{tpu_custom_call.1} parent=11 // pred_region
          _
        $region16: #{tpu_custom_call.1} parent=11 // pred_fallthru
          _
        // Predicated region
        $region17: #{tpu_custom_call.1} parent=11 // pred_check
          %p375 = pneg %p95
        $region18: #{tpu_custom_call.1} parent=11 // pred_check_branch
          %377 = sbr.rel (%p375) target = $region20
        $region19: #{tpu_custom_call.1} parent=11 // pred_region
          _
        $region20: #{tpu_custom_call.1} parent=11 // pred_fallthru
          _
        // Predicated region
        $region21: #{tpu_custom_call.1} parent=11 // pred_check
          %p378 = pneg %p116
        $region22: #{tpu_custom_call.1} parent=11 // pred_check_branch
          %380 = sbr.rel (%p378) target = $region24
        $region23: #{tpu_custom_call.1} parent=11 // pred_region
          _
        $region24: #{tpu_custom_call.1} parent=11 // pred_fallthru
          _
        // Predicated region
        $region25: #{tpu_custom_call.1} parent=11 // pred_check
          %p381 = pneg %p137
        $region26: #{tpu_custom_call.1} parent=11 // pred_check_branch
          %383 = sbr.rel (%p381) target = $region28
        $region27: #{tpu_custom_call.1} parent=11 // pred_region
          _
        $region28: #{tpu_custom_call.1} parent=11 // pred_fallthru
          _
        // Predicated region
        $region29: #{tpu_custom_call.1} parent=11 // pred_check
          %p384 = pneg %p158
        $region30: #{tpu_custom_call.1} parent=11 // pred_check_branch
          %386 = sbr.rel (%p384) target = $region32
        $region31: #{tpu_custom_call.1} parent=11 // pred_region
          _
        $region32: #{tpu_custom_call.1} parent=11 // pred_fallthru
          _
        // Predicated region
        $region33: #{tpu_custom_call.1} parent=11 // pred_check
          %p387 = pneg %p179
        $region34: #{tpu_custom_call.1} parent=11 // pred_check_branch
          %389 = sbr.rel (%p387) target = $region36
        $region35: #{tpu_custom_call.1} parent=11 // pred_region
          _
        $region36: #{tpu_custom_call.1} parent=11 // pred_fallthru
          _
        // Predicated region
        $region37: #{tpu_custom_call.1} parent=11 // pred_check
          %p390 = pneg %p200
        $region38: #{tpu_custom_call.1} parent=11 // pred_check_branch
          %392 = sbr.rel (%p390) target = $region40
        $region39: #{tpu_custom_call.1} parent=11 // pred_region
          _
        $region40: #{tpu_custom_call.1} parent=11 // pred_fallthru
          _
        // Predicated region
        $region41: #{tpu_custom_call.1} parent=11 // pred_check
          %p393 = pneg %p221
        $region42: #{tpu_custom_call.1} parent=11 // pred_check_branch
          %395 = sbr.rel (%p393) target = $region44
        $region43: #{tpu_custom_call.1} parent=11 // pred_region
          _
        $region44: #{tpu_custom_call.1} parent=11 // pred_fallthru
          _
        // Predicated region
        $region45: #{tpu_custom_call.1} parent=11 // pred_check
          %p396 = pneg %p242
        $region46: #{tpu_custom_call.1} parent=11 // pred_check_branch
          %398 = sbr.rel (%p396) target = $region48
        $region47: #{tpu_custom_call.1} parent=11 // pred_region
          _
        $region48: #{tpu_custom_call.1} parent=11 // pred_fallthru
          _
        // Predicated region
        $region49: #{tpu_custom_call.1} parent=11 // pred_check
          %p399 = pneg %p263
        $region50: #{tpu_custom_call.1} parent=11 // pred_check_branch
          %401 = sbr.rel (%p399) target = $region52
        $region51: #{tpu_custom_call.1} parent=11 // pred_region
          _
        $region52: #{tpu_custom_call.1} parent=11 // pred_fallthru
          _
        // Predicated region
        $region53: #{tpu_custom_call.1} parent=11 // pred_check
          %p402 = pneg %p284
        $region54: #{tpu_custom_call.1} parent=11 // pred_check_branch
          %404 = sbr.rel (%p402) target = $region56
        $region55: #{tpu_custom_call.1} parent=11 // pred_region
          _
        $region56: #{tpu_custom_call.1} parent=11 // pred_fallthru
          _
        // Predicated region
        $region57: #{tpu_custom_call.1} parent=11 // pred_check
          %p405 = pneg %p305
        $region58: #{tpu_custom_call.1} parent=11 // pred_check_branch
          %407 = sbr.rel (%p405) target = $region60
        $region59: #{tpu_custom_call.1} parent=11 // pred_region
          _
        $region60: #{tpu_custom_call.1} parent=11 // pred_fallthru
          _
      $region12: #{tpu_custom_call.1} parent=5 // pred_fallthru
        _
      %p408 = scmp.lt.s32.totalorder %s27, 2
      // Predicated region
      $region61: #{tpu_custom_call.1} parent=5 // pred_check
        %p409 = pneg %p408
      $region62: #{tpu_custom_call.1} parent=5 // pred_check_branch
        %411 = sbr.rel (%p409) target = $region64
      $region63: #{tpu_custom_call.1} parent=5 // pred_region
        // Predicated region
        $region65: #{tpu_custom_call.1} parent=63 // pred_check
          %p412 = pneg %p47
        $region66: #{tpu_custom_call.1} parent=63 // pred_check_branch
          %414 = sbr.rel (%p412) target = $region68
        $region67: #{tpu_custom_call.1} parent=63 // pred_region
          %p415 = scmp.lt.s32.totalorder %s27, 1
          %s416 = scalar_select %p415, %s27, 1
          %s417 = smul.addr %s416, 8
          %s418 = scalar_lea.vmem %s0, %s417
        $region68: #{tpu_custom_call.1} parent=63 // pred_fallthru
          _
      $region64: #{tpu_custom_call.1} parent=5 // pred_fallthru
        _
      %p419 = scmp.le.s32.totalorder 1, %s27
      %p420 = scmp.lt.s32.totalorder %s27, 3
      %p421 = pnand %p419, %p420
      %p422 = pneg %p421
      // Predicated region
      $region69: #{tpu_custom_call.1} parent=5 // pred_check
        _
      $region70: #{tpu_custom_call.1} parent=5 // pred_check_branch
        %424 = sbr.rel (%p421) target = $region72
      $region71: #{tpu_custom_call.1} parent=5 // pred_region
        %s425 = ssub.s32 %s27, 1
        %p426 = scmp.lt.s32.totalorder %s32, 1
        %s427 = scalar_select %p426, %s32, 1
        %s428 = smul.addr %s427, 8
        %s429 = scalar_lea.vmem %s0, %s428
        %p430 = pneg %p53
        %p431 = pneg %p50
        %p432 = pneg %p74
        %p433 = pneg %p71
        %p434 = pneg %p95
        %p435 = pneg %p92
        %p436 = pneg %p116
        %p437 = pneg %p113
        %p438 = pneg %p137
        %p439 = pneg %p134
        %p440 = pneg %p158
        %p441 = pneg %p155
        %p442 = pneg %p179
        %p443 = pneg %p176
        %p444 = pneg %p200
        %p445 = pneg %p197
        %p446 = pneg %p221
        %p447 = pneg %p218
        %p448 = pneg %p242
        %p449 = pneg %p239
        %p450 = pneg %p263
        %p451 = pneg %p260
        %p452 = pneg %p284
        %p453 = pneg %p281
        %p454 = pneg %p305
        %p455 = pneg %p302
        %p456 = pneg %p331
        %p457 = pneg %p328
        %s458 = sand.u32 %s318, 1
        %s459 = scalar_lea.sflag [#allocation3], %s458
        %s460 = sand.u32 %s318, 1
        %s461 = smul.addr %s460, 8
        %s462 = scalar_lea.vmem [#allocation2], %s461
        %p463 = pneg %p357
        %p464 = pneg %p354
        %s465 = sand.u32 %s344, 1
        %s466 = scalar_lea.sflag [#allocation5], %s465
        %s467 = sand.u32 %s344, 1
        %s468 = smul.addr %s467, 16
        %s469 = scalar_lea.vmem [#allocation4], %s468
        %p470 = scmp.lt.s32.totalorder %s32, 1
        %s471 = scalar_select %p470, %s32, 1
        %s472 = smul.addr %s471, 8
        %s473 = scalar_lea.vmem %s0, %s472
        %v474 = vld [vmem:[%s473] sm:$0xff]
        %v475 = vld [vmem:[%s1] sm:$0x1]
        %v476 = vld [vmem:[%s2] sm:$0x1]
        %vm477 = vcmask 261120
        %v478 = vsel %vm477, %v474, 0.0
        %479 = vadd.xlane.f32.xlu0 %v478
        %v480 = vpop.xlane.xlu0 %479
        %v481 = vrcp.pop 32.0
        %v482 = vmul.f32 %v480, %v481
        %v483 = vsub.f32 %v474, %v482
        %v484 = vmul.f32 %v483, %v483
        %v485 = vsel %vm477, %v484, 0.0
        %486 = vadd.xlane.f32.xlu0 %v485
        %v487 = vpop.xlane.xlu0 %486
        %v488 = vmul.f32 %v487, %v481
        %v489 = vadd.f32 %v488, 1e-05
        %v490 = vrsqrt.pop %v489
        %v491 = vmul.f32 %v489, %v490
        %vm492 = vcmp.eq.f32.partialorder %v489, inf
        %v493 = vsel %vm492, %v489, %v491
        %vm494 = vcmp.eq.f32.partialorder %v489, 0.0
        %v495 = vand.u32 %v489, 2147483648
        %v496 = vsel %vm494, %v495, %v493
        %v497 = vrcp.pop %v496
        %v498 = vmul.f32 %v483, %v497
        %v500 = vlaneseq
        %v501 = vshrl.u32 %v500, 7
        %v502 = vsub.s32 0, %v501
        %v503 = vrot.slane %v475, %v502
        %v505 = vmul.f32 %v498, %v503
        %v507 = vlaneseq
        %v508 = vshrl.u32 %v507, 7
        %v509 = vsub.s32 0, %v508
        %v510 = vrot.slane %v476, %v509
        %v512 = vadd.f32 %v505, %v510
        %v513 = vld [vmem:[%s3] sm:$0xff]
        %v514 = vld [vmem:[%s3 + $0x8] sm:$0xff]
        %v515 = vld [vmem:[%s3 + $0x10] sm:$0xff]
        %v516 = vld [vmem:[%s3 + $0x18] sm:$0xff]
        %v517 = vld [vmem:[%s4] sm:$0x1]
        %v519 = vlaneseq
        %v520 = vshrl.u32 %v519, 7
        %v521 = vsub.s32 0, %v520
        %v522 = vrot.slane %v517, %v521
        %v525 = vsel %vm477, %v512, 0
        %527 = vmatprep.subr.mxu0 0.0
        %528 = vmatpush1.msra.mxu0 %v513
        %529 = vmatprep.subr.mxu0 0.0
        %530 = vmatpush1.msra.mxu0 %v514
        %531 = vmatprep.subr.mxu0 0.0
        %532 = vmatpush1.msra.mxu0 %v515
        %533 = vmatprep.subr.mxu0 0.0
        %534 = vmatpush1.msra.mxu0 %v516
        %535 = vmatprep.subr.mxu0 0.0
        %536 = vmatpush1.msra.mxu0 0.0
        %537 = vmatprep.subr.mxu0 0.0
        %538 = vmatpush1.msra.mxu0 0.0
        %539 = vmatprep.subr.mxu0 0.0
        %540 = vmatpush1.msra.mxu0 0.0
        %541 = vmatprep.subr.mxu0 0.0
        %542 = vmatpush1.msra.mxu0 0.0
        %543 = vmatprep.subr.mxu0 0.0
        %544 = vmatpush1.msra.mxu0 0.0
        %545 = vmatprep.subr.mxu0 0.0
        %546 = vmatpush1.msra.mxu0 0.0
        %547 = vmatprep.subr.mxu0 0.0
        %548 = vmatpush1.msra.mxu0 0.0
        %549 = vmatprep.subr.mxu0 0.0
        %550 = vmatpush1.msra.mxu0 0.0
        %551 = vmatprep.subr.mxu0 0.0
        %552 = vmatpush1.msra.mxu0 0.0
        %553 = vmatprep.subr.mxu0 0.0
        %554 = vmatpush1.msra.mxu0 0.0
        %555 = vmatprep.subr.mxu0 0.0
        %556 = vmatpush1.msra.mxu0 0.0
        %557 = vmatprep.subr.mxu0 0.0
        %558 = vmatpush1.msra.mxu0 0.0
        %559 = vmatprep.subr.mxu0 0.0
        %560 = vmatpush1.msra.mxu0 0.0
        %561 = vmatprep.subr.mxu0 0.0
        %562 = vmatpush1.msra.mxu0 0.0
        %563 = vmatprep.subr.mxu0 0.0
        %564 = vmatpush1.msra.mxu0 0.0
        %565 = vmatprep.subr.mxu0 0.0
        %566 = vmatpush1.msra.mxu0 0.0
        %567 = vmatprep.subr.mxu0 0.0
        %568 = vmatpush1.msra.mxu0 0.0
        %569 = vmatprep.subr.mxu0 0.0
        %570 = vmatpush1.msra.mxu0 0.0
        %571 = vmatprep.subr.mxu0 0.0
        %572 = vmatpush1.msra.mxu0 0.0
        %573 = vmatprep.subr.mxu0 0.0
        %574 = vmatpush1.msra.mxu0 0.0
        %575 = vmatprep.subr.mxu0 0.0
        %576 = vmatpush1.msra.mxu0 0.0
        %577 = vmatprep.subr.mxu0 0.0
        %578 = vmatpush1.msra.mxu0 0.0
        %579 = vmatprep.subr.mxu0 0.0
        %580 = vmatpush1.msra.mxu0 0.0
        %581 = vmatprep.subr.mxu0 0.0
        %582 = vmatpush1.msra.mxu0 0.0
        %583 = vmatprep.subr.mxu0 0.0
        %584 = vmatpush1.msra.mxu0 0.0
        %585 = vmatprep.subr.mxu0 0.0
        %586 = vmatpush1.msra.mxu0 0.0
        %587 = vmatprep.subr.mxu0 0.0
        %588 = vmatpush1.msra.mxu0 0.0
        %589 = vmatprep.subr.mxu0 0.0
        %590 = vmatpush1.msra.mxu0 0.0
        %591 = vmatprep.mubr.f32.mxu0 0.0
        %592 = vmatmul.mubr.f32.gmra.mrb[0].mxu0 %v525
        %v593 = vpop.f32.mrb[0].mxu0
        %v594 = vadd.f32 %v522, %v593
        %v595 = vpop.f32.mrb[0].mxu0
        %596 = vdwg.mxu0
        %598 = vrot.lane.b32.xlu0 %v594, 96
        %v599 = vpop.permute.xlu0 %598
        %601 = vst.msk [vmem:[%s469] sm:$0xff] %vm477, %v599
        %602 = vrot.lane.b32.xlu0 %v594, 64
        %v603 = vpop.permute.xlu0 %602
        %s605 = scalar_lea.vmem %s469, 8 [#allocation4]
        %606 = vst.msk [vmem:[%s605] sm:$0xff] %vm477, %v603
        %v607 = vlaneseq
        %v608 = vshrl.u32 %v607, 7
        %v609 = vlaneseq
        %v610 = vand.u32 %v609, 127
        %vm611 = vcmp.ge.s32.totalorder %v608, %v610
        %vm612 = vcmask 64512
        %v613 = vsel %vm612, %v594, 0
        %v615 = vsel %vm612, %v599, 0
        %617 = vmatprep.subr.mxu0 0.0
        %618 = vmatpush1.xpose.msra.mxu0 %v615
        %619 = vmatprep.subr.mxu0 0.0
        %620 = vmatpush1.xpose.msra.mxu0 0.0
        %621 = vmatprep.subr.mxu0 0.0
        %622 = vmatpush1.xpose.msra.mxu0 0.0
        %623 = vmatprep.subr.mxu0 0.0
        %624 = vmatpush1.xpose.msra.mxu0 0.0
        %625 = vmatprep.subr.mxu0 0.0
        %626 = vmatpush1.xpose.msra.mxu0 0.0
        %627 = vmatprep.subr.mxu0 0.0
        %628 = vmatpush1.xpose.msra.mxu0 0.0
        %629 = vmatprep.subr.mxu0 0.0
        %630 = vmatpush1.xpose.msra.mxu0 0.0
        %631 = vmatprep.subr.mxu0 0.0
        %632 = vmatpush1.xpose.msra.mxu0 0.0
        %633 = vmatprep.subr.mxu0 0.0
        %634 = vmatpush1.xpose.msra.mxu0 0.0
        %635 = vmatprep.subr.mxu0 0.0
        %636 = vmatpush1.xpose.msra.mxu0 0.0
        %637 = vmatprep.subr.mxu0 0.0
        %638 = vmatpush1.xpose.msra.mxu0 0.0
        %639 = vmatprep.subr.mxu0 0.0
        %640 = vmatpush1.xpose.msra.mxu0 0.0
        %641 = vmatprep.subr.mxu0 0.0
        %642 = vmatpush1.xpose.msra.mxu0 0.0
        %643 = vmatprep.subr.mxu0 0.0
        %644 = vmatpush1.xpose.msra.mxu0 0.0
        %645 = vmatprep.subr.mxu0 0.0
        %646 = vmatpush1.xpose.msra.mxu0 0.0
        %647 = vmatprep.subr.mxu0 0.0
        %648 = vmatpush1.xpose.msra.mxu0 0.0
        %649 = vmatprep.subr.mxu0 0.0
        %650 = vmatpush1.xpose.msra.mxu0 0.0
        %651 = vmatprep.subr.mxu0 0.0
        %652 = vmatpush1.xpose.msra.mxu0 0.0
        %653 = vmatprep.subr.mxu0 0.0
        %654 = vmatpush1.xpose.msra.mxu0 0.0
        %655 = vmatprep.subr.mxu0 0.0
        %656 = vmatpush1.xpose.msra.mxu0 0.0
        %657 = vmatprep.subr.mxu0 0.0
        %658 = vmatpush1.xpose.msra.mxu0 0.0
        %659 = vmatprep.subr.mxu0 0.0
        %660 = vmatpush1.xpose.msra.mxu0 0.0
        %661 = vmatprep.subr.mxu0 0.0
        %662 = vmatpush1.xpose.msra.mxu0 0.0
        %663 = vmatprep.subr.mxu0 0.0
        %664 = vmatpush1.xpose.msra.mxu0 0.0
        %665 = vmatprep.subr.mxu0 0.0
        %666 = vmatpush1.xpose.msra.mxu0 0.0
        %667 = vmatprep.subr.mxu0 0.0
        %668 = vmatpush1.xpose.msra.mxu0 0.0
        %669 = vmatprep.subr.mxu0 0.0
        %670 = vmatpush1.xpose.msra.mxu0 0.0
        %671 = vmatprep.subr.mxu0 0.0
        %672 = vmatpush1.xpose.msra.mxu0 0.0
        %673 = vmatprep.subr.mxu0 0.0
        %674 = vmatpush1.xpose.msra.mxu0 0.0
        %675 = vmatprep.subr.mxu0 0.0
        %676 = vmatpush1.xpose.msra.mxu0 0.0
        %677 = vmatprep.subr.mxu0 0.0
        %678 = vmatpush1.xpose.msra.mxu0 0.0
        %679 = vmatprep.subr.mxu0 0.0
        %680 = vmatpush1.xpose.msra.mxu0 0.0
        %681 = vmatprep.mubr.f32.mxu0 0.0
        %682 = vmatmul.mubr.f32.gmra.mrb[0].mxu0 %v613
        %v683 = vpop.f32.mrb[0].mxu0
        %v684 = vadd.f32 0.0, %v683
        %v685 = vpop.f32.mrb[0].mxu0
        %686 = vdwg.mxu0
        %v687 = vsel %vm611, %v684, -1e+10
        %v688 = vsel %vm612, %v687, -inf
        %689 = vmax.xlane.f32.xlu0 %v688
        %v690 = vpop.xlane.xlu0 %689
        %v691 = vsub.f32 -inf, %v690
        %v692 = vmul.f32 %v691, 1.442695
        %v693 = vpow.pop %v692
        %v694 = vsub.f32 %v687, %v690
        %v695 = vmul.f32 %v694, 1.442695
        %v696 = vpow.pop %v695
        %v697 = vmul.f32 %v693, 0.0
        %v698 = vsel %vm612, %v696, 0.0
        %699 = vadd.xlane.f32.xlu0 %v698
        %v700 = vpop.xlane.xlu0 %699
        %v701 = vadd.f32 %v697, %v700
        %v703 = vsel %vm612, %v696, 0
        %705 = vmatprep.subr.mxu0 0.0
        %706 = vmatpush1.msra.mxu0 %v603
        %707 = vmatprep.subr.mxu0 0.0
        %708 = vmatpush1.msra.mxu0 0.0
        %709 = vmatprep.subr.mxu0 0.0
        %710 = vmatpush1.msra.mxu0 0.0
        %711 = vmatprep.subr.mxu0 0.0
        %712 = vmatpush1.msra.mxu0 0.0
        %713 = vmatprep.subr.mxu0 0.0
        %714 = vmatpush1.msra.mxu0 0.0
        %715 = vmatprep.subr.mxu0 0.0
        %716 = vmatpush1.msra.mxu0 0.0
        %717 = vmatprep.subr.mxu0 0.0
        %718 = vmatpush1.msra.mxu0 0.0
        %719 = vmatprep.subr.mxu0 0.0
        %720 = vmatpush1.msra.mxu0 0.0
        %721 = vmatprep.subr.mxu0 0.0
        %722 = vmatpush1.msra.mxu0 0.0
        %723 = vmatprep.subr.mxu0 0.0
        %724 = vmatpush1.msra.mxu0 0.0
        %725 = vmatprep.subr.mxu0 0.0
        %726 = vmatpush1.msra.mxu0 0.0
        %727 = vmatprep.subr.mxu0 0.0
        %728 = vmatpush1.msra.mxu0 0.0
        %729 = vmatprep.subr.mxu0 0.0
        %730 = vmatpush1.msra.mxu0 0.0
        %731 = vmatprep.subr.mxu0 0.0
        %732 = vmatpush1.msra.mxu0 0.0
        %733 = vmatprep.subr.mxu0 0.0
        %734 = vmatpush1.msra.mxu0 0.0
        %735 = vmatprep.subr.mxu0 0.0
        %736 = vmatpush1.msra.mxu0 0.0
        %737 = vmatprep.subr.mxu0 0.0
        %738 = vmatpush1.msra.mxu0 0.0
        %739 = vmatprep.subr.mxu0 0.0
        %740 = vmatpush1.msra.mxu0 0.0
        %741 = vmatprep.subr.mxu0 0.0
        %742 = vmatpush1.msra.mxu0 0.0
        %743 = vmatprep.subr.mxu0 0.0
        %744 = vmatpush1.msra.mxu0 0.0
        %745 = vmatprep.subr.mxu0 0.0
        %746 = vmatpush1.msra.mxu0 0.0
        %747 = vmatprep.subr.mxu0 0.0
        %748 = vmatpush1.msra.mxu0 0.0
        %749 = vmatprep.subr.mxu0 0.0
        %750 = vmatpush1.msra.mxu0 0.0
        %751 = vmatprep.subr.mxu0 0.0
        %752 = vmatpush1.msra.mxu0 0.0
        %753 = vmatprep.subr.mxu0 0.0
        %754 = vmatpush1.msra.mxu0 0.0
        %755 = vmatprep.subr.mxu0 0.0
        %756 = vmatpush1.msra.mxu0 0.0
        %757 = vmatprep.subr.mxu0 0.0
        %758 = vmatpush1.msra.mxu0 0.0
        %759 = vmatprep.subr.mxu0 0.0
        %760 = vmatpush1.msra.mxu0 0.0
        %761 = vmatprep.subr.mxu0 0.0
        %762 = vmatpush1.msra.mxu0 0.0
        %763 = vmatprep.subr.mxu0 0.0
        %764 = vmatpush1.msra.mxu0 0.0
        %765 = vmatprep.subr.mxu0 0.0
        %766 = vmatpush1.msra.mxu0 0.0
        %767 = vmatprep.subr.mxu0 0.0
        %768 = vmatpush1.msra.mxu0 0.0
        %769 = vmatprep.mubr.f32.mxu0 0.0
        %770 = vmatmul.mubr.f32.gmra.mrb[0].mxu0 %v703
        %v771 = vpop.f32.mrb[0].mxu0
        %v772 = vadd.f32 0.0, %v771
        %v773 = vpop.f32.mrb[0].mxu0
        %774 = vdwg.mxu0
        %v775 = vadd.f32 %v697, %v772
        %776 = vrot.lane.b32.xlu0 %v594, 120
        %v777 = vpop.permute.xlu0 %776
        %778 = vrot.lane.b32.xlu0 %v594, 88
        %v779 = vpop.permute.xlu0 %778
        %v780 = vsel %vm612, %v777, 0
        %v782 = vsel %vm612, %v779, 0
        %784 = vmatprep.subr.mxu0 0.0
        %785 = vmatpush1.xpose.msra.mxu0 %v782
        %786 = vmatprep.subr.mxu0 0.0
        %787 = vmatpush1.xpose.msra.mxu0 0.0
        %788 = vmatprep.subr.mxu0 0.0
        %789 = vmatpush1.xpose.msra.mxu0 0.0
        %790 = vmatprep.subr.mxu0 0.0
        %791 = vmatpush1.xpose.msra.mxu0 0.0
        %792 = vmatprep.subr.mxu0 0.0
        %793 = vmatpush1.xpose.msra.mxu0 0.0
        %794 = vmatprep.subr.mxu0 0.0
        %795 = vmatpush1.xpose.msra.mxu0 0.0
        %796 = vmatprep.subr.mxu0 0.0
        %797 = vmatpush1.xpose.msra.mxu0 0.0
        %798 = vmatprep.subr.mxu0 0.0
        %799 = vmatpush1.xpose.msra.mxu0 0.0
        %800 = vmatprep.subr.mxu0 0.0
        %801 = vmatpush1.xpose.msra.mxu0 0.0
        %802 = vmatprep.subr.mxu0 0.0
        %803 = vmatpush1.xpose.msra.mxu0 0.0
        %804 = vmatprep.subr.mxu0 0.0
        %805 = vmatpush1.xpose.msra.mxu0 0.0
        %806 = vmatprep.subr.mxu0 0.0
        %807 = vmatpush1.xpose.msra.mxu0 0.0
        %808 = vmatprep.subr.mxu0 0.0
        %809 = vmatpush1.xpose.msra.mxu0 0.0
        %810 = vmatprep.subr.mxu0 0.0
        %811 = vmatpush1.xpose.msra.mxu0 0.0
        %812 = vmatprep.subr.mxu0 0.0
        %813 = vmatpush1.xpose.msra.mxu0 0.0
        %814 = vmatprep.subr.mxu0 0.0
        %815 = vmatpush1.xpose.msra.mxu0 0.0
        %816 = vmatprep.subr.mxu0 0.0
        %817 = vmatpush1.xpose.msra.mxu0 0.0
        %818 = vmatprep.subr.mxu0 0.0
        %819 = vmatpush1.xpose.msra.mxu0 0.0
        %820 = vmatprep.subr.mxu0 0.0
        %821 = vmatpush1.xpose.msra.mxu0 0.0
        %822 = vmatprep.subr.mxu0 0.0
        %823 = vmatpush1.xpose.msra.mxu0 0.0
        %824 = vmatprep.subr.mxu0 0.0
        %825 = vmatpush1.xpose.msra.mxu0 0.0
        %826 = vmatprep.subr.mxu0 0.0
        %827 = vmatpush1.xpose.msra.mxu0 0.0
        %828 = vmatprep.subr.mxu0 0.0
        %829 = vmatpush1.xpose.msra.mxu0 0.0
        %830 = vmatprep.subr.mxu0 0.0
        %831 = vmatpush1.xpose.msra.mxu0 0.0
        %832 = vmatprep.subr.mxu0 0.0
        %833 = vmatpush1.xpose.msra.mxu0 0.0
        %834 = vmatprep.subr.mxu0 0.0
        %835 = vmatpush1.xpose.msra.mxu0 0.0
        %836 = vmatprep.subr.mxu0 0.0
        %837 = vmatpush1.xpose.msra.mxu0 0.0
        %838 = vmatprep.subr.mxu0 0.0
        %839 = vmatpush1.xpose.msra.mxu0 0.0
        %840 = vmatprep.subr.mxu0 0.0
        %841 = vmatpush1.xpose.msra.mxu0 0.0
        %842 = vmatprep.subr.mxu0 0.0
        %843 = vmatpush1.xpose.msra.mxu0 0.0
        %844 = vmatprep.subr.mxu0 0.0
        %845 = vmatpush1.xpose.msra.mxu0 0.0
        %846 = vmatprep.subr.mxu0 0.0
        %847 = vmatpush1.xpose.msra.mxu0 0.0
        %848 = vmatprep.mubr.f32.mxu0 0.0
        %849 = vmatmul.mubr.f32.gmra.mrb[0].mxu0 %v780
        %v850 = vpop.f32.mrb[0].mxu0
        %v851 = vadd.f32 0.0, %v850
        %v852 = vpop.f32.mrb[0].mxu0
        %853 = vdwg.mxu0
        %v854 = vsel %vm611, %v851, -1e+10
        %v855 = vsel %vm612, %v854, -inf
        %856 = vmax.xlane.f32.xlu0 %v855
        %v857 = vpop.xlane.xlu0 %856
        %v858 = vsub.f32 -inf, %v857
        %v859 = vmul.f32 %v858, 1.442695
        %v860 = vpow.pop %v859
        %v861 = vsub.f32 %v854, %v857
        %v862 = vmul.f32 %v861, 1.442695
        %v863 = vpow.pop %v862
        %v864 = vmul.f32 %v860, 0.0
        %v865 = vsel %vm612, %v863, 0.0
        %866 = vadd.xlane.f32.xlu0 %v865
        %v867 = vpop.xlane.xlu0 %866
        %v868 = vadd.f32 %v864, %v867
        %869 = vrot.lane.b32.xlu0 %v594, 56
        %v870 = vpop.permute.xlu0 %869
        %v873 = vsel %vm612, %v863, 0
        %875 = vmatprep.subr.mxu0 0.0
        %876 = vmatpush1.msra.mxu0 %v870
        %877 = vmatprep.subr.mxu0 0.0
        %878 = vmatpush1.msra.mxu0 0.0
        %879 = vmatprep.subr.mxu0 0.0
        %880 = vmatpush1.msra.mxu0 0.0
        %881 = vmatprep.subr.mxu0 0.0
        %882 = vmatpush1.msra.mxu0 0.0
        %883 = vmatprep.subr.mxu0 0.0
        %884 = vmatpush1.msra.mxu0 0.0
        %885 = vmatprep.subr.mxu0 0.0
        %886 = vmatpush1.msra.mxu0 0.0
        %887 = vmatprep.subr.mxu0 0.0
        %888 = vmatpush1.msra.mxu0 0.0
        %889 = vmatprep.subr.mxu0 0.0
        %890 = vmatpush1.msra.mxu0 0.0
        %891 = vmatprep.subr.mxu0 0.0
        %892 = vmatpush1.msra.mxu0 0.0
        %893 = vmatprep.subr.mxu0 0.0
        %894 = vmatpush1.msra.mxu0 0.0
        %895 = vmatprep.subr.mxu0 0.0
        %896 = vmatpush1.msra.mxu0 0.0
        %897 = vmatprep.subr.mxu0 0.0
        %898 = vmatpush1.msra.mxu0 0.0
        %899 = vmatprep.subr.mxu0 0.0
        %900 = vmatpush1.msra.mxu0 0.0
        %901 = vmatprep.subr.mxu0 0.0
        %902 = vmatpush1.msra.mxu0 0.0
        %903 = vmatprep.subr.mxu0 0.0
        %904 = vmatpush1.msra.mxu0 0.0
        %905 = vmatprep.subr.mxu0 0.0
        %906 = vmatpush1.msra.mxu0 0.0
        %907 = vmatprep.subr.mxu0 0.0
        %908 = vmatpush1.msra.mxu0 0.0
        %909 = vmatprep.subr.mxu0 0.0
        %910 = vmatpush1.msra.mxu0 0.0
        %911 = vmatprep.subr.mxu0 0.0
        %912 = vmatpush1.msra.mxu0 0.0
        %913 = vmatprep.subr.mxu0 0.0
        %914 = vmatpush1.msra.mxu0 0.0
        %915 = vmatprep.subr.mxu0 0.0
        %916 = vmatpush1.msra.mxu0 0.0
        %917 = vmatprep.subr.mxu0 0.0
        %918 = vmatpush1.msra.mxu0 0.0
        %919 = vmatprep.subr.mxu0 0.0
        %920 = vmatpush1.msra.mxu0 0.0
        %921 = vmatprep.subr.mxu0 0.0
        %922 = vmatpush1.msra.mxu0 0.0
        %923 = vmatprep.subr.mxu0 0.0
        %924 = vmatpush1.msra.mxu0 0.0
        %925 = vmatprep.subr.mxu0 0.0
        %926 = vmatpush1.msra.mxu0 0.0
        %927 = vmatprep.subr.mxu0 0.0
        %928 = vmatpush1.msra.mxu0 0.0
        %929 = vmatprep.subr.mxu0 0.0
        %930 = vmatpush1.msra.mxu0 0.0
        %931 = vmatprep.subr.mxu0 0.0
        %932 = vmatpush1.msra.mxu0 0.0
        %933 = vmatprep.subr.mxu0 0.0
        %934 = vmatpush1.msra.mxu0 0.0
        %935 = vmatprep.subr.mxu0 0.0
        %936 = vmatpush1.msra.mxu0 0.0
        %937 = vmatprep.subr.mxu0 0.0
        %938 = vmatpush1.msra.mxu0 0.0
        %939 = vmatprep.mubr.f32.mxu0 0.0
        %940 = vmatmul.mubr.f32.gmra.mrb[0].mxu0 %v873
        %v941 = vpop.f32.mrb[0].mxu0
        %v942 = vadd.f32 0.0, %v941
        %v943 = vpop.f32.mrb[0].mxu0
        %944 = vdwg.mxu0
        %v945 = vadd.f32 %v864, %v942
        %946 = vrot.lane.b32.xlu0 %v594, 112
        %v947 = vpop.permute.xlu0 %946
        %948 = vrot.lane.b32.xlu0 %v594, 80
        %v949 = vpop.permute.xlu0 %948
        %v950 = vsel %vm612, %v947, 0
        %v952 = vsel %vm612, %v949, 0
        %954 = vmatprep.subr.mxu0 0.0
        %955 = vmatpush1.xpose.msra.mxu0 %v952
        %956 = vmatprep.subr.mxu0 0.0
        %957 = vmatpush1.xpose.msra.mxu0 0.0
        %958 = vmatprep.subr.mxu0 0.0
        %959 = vmatpush1.xpose.msra.mxu0 0.0
        %960 = vmatprep.subr.mxu0 0.0
        %961 = vmatpush1.xpose.msra.mxu0 0.0
        %962 = vmatprep.subr.mxu0 0.0
        %963 = vmatpush1.xpose.msra.mxu0 0.0
        %964 = vmatprep.subr.mxu0 0.0
        %965 = vmatpush1.xpose.msra.mxu0 0.0
        %966 = vmatprep.subr.mxu0 0.0
        %967 = vmatpush1.xpose.msra.mxu0 0.0
        %968 = vmatprep.subr.mxu0 0.0
        %969 = vmatpush1.xpose.msra.mxu0 0.0
        %970 = vmatprep.subr.mxu0 0.0
        %971 = vmatpush1.xpose.msra.mxu0 0.0
        %972 = vmatprep.subr.mxu0 0.0
        %973 = vmatpush1.xpose.msra.mxu0 0.0
        %974 = vmatprep.subr.mxu0 0.0
        %975 = vmatpush1.xpose.msra.mxu0 0.0
        %976 = vmatprep.subr.mxu0 0.0
        %977 = vmatpush1.xpose.msra.mxu0 0.0
        %978 = vmatprep.subr.mxu0 0.0
        %979 = vmatpush1.xpose.msra.mxu0 0.0
        %980 = vmatprep.subr.mxu0 0.0
        %981 = vmatpush1.xpose.msra.mxu0 0.0
        %982 = vmatprep.subr.mxu0 0.0
        %983 = vmatpush1.xpose.msra.mxu0 0.0
        %984 = vmatprep.subr.mxu0 0.0
        %985 = vmatpush1.xpose.msra.mxu0 0.0
        %986 = vmatprep.subr.mxu0 0.0
        %987 = vmatpush1.xpose.msra.mxu0 0.0
        %988 = vmatprep.subr.mxu0 0.0
        %989 = vmatpush1.xpose.msra.mxu0 0.0
        %990 = vmatprep.subr.mxu0 0.0
        %991 = vmatpush1.xpose.msra.mxu0 0.0
        %992 = vmatprep.subr.mxu0 0.0
        %993 = vmatpush1.xpose.msra.mxu0 0.0
        %994 = vmatprep.subr.mxu0 0.0
        %995 = vmatpush1.xpose.msra.mxu0 0.0
        %996 = vmatprep.subr.mxu0 0.0
        %997 = vmatpush1.xpose.msra.mxu0 0.0
        %998 = vmatprep.subr.mxu0 0.0
        %999 = vmatpush1.xpose.msra.mxu0 0.0
        %1000 = vmatprep.subr.mxu0 0.0
        %1001 = vmatpush1.xpose.msra.mxu0 0.0
        %1002 = vmatprep.subr.mxu0 0.0
        %1003 = vmatpush1.xpose.msra.mxu0 0.0
        %1004 = vmatprep.subr.mxu0 0.0
        %1005 = vmatpush1.xpose.msra.mxu0 0.0
        %1006 = vmatprep.subr.mxu0 0.0
        %1007 = vmatpush1.xpose.msra.mxu0 0.0
        %1008 = vmatprep.subr.mxu0 0.0
        %1009 = vmatpush1.xpose.msra.mxu0 0.0
        %1010 = vmatprep.subr.mxu0 0.0
        %1011 = vmatpush1.xpose.msra.mxu0 0.0
        %1012 = vmatprep.subr.mxu0 0.0
        %1013 = vmatpush1.xpose.msra.mxu0 0.0
        %1014 = vmatprep.subr.mxu0 0.0
        %1015 = vmatpush1.xpose.msra.mxu0 0.0
        %1016 = vmatprep.subr.mxu0 0.0
        %1017 = vmatpush1.xpose.msra.mxu0 0.0
        %1018 = vmatprep.mubr.f32.mxu0 0.0
        %1019 = vmatmul.mubr.f32.gmra.mrb[0].mxu0 %v950
        %v1020 = vpop.f32.mrb[0].mxu0
        %v1021 = vadd.f32 0.0, %v1020
        %v1022 = vpop.f32.mrb[0].mxu0
        %1023 = vdwg.mxu0
        %v1024 = vsel %vm611, %v1021, -1e+10
        %v1025 = vsel %vm612, %v1024, -inf
        %1026 = vmax.xlane.f32.xlu0 %v1025
        %v1027 = vpop.xlane.xlu0 %1026
        %v1028 = vsub.f32 -inf, %v1027
        %v1029 = vmul.f32 %v1028, 1.442695
        %v1030 = vpow.pop %v1029
        %v1031 = vsub.f32 %v1024, %v1027
        %v1032 = vmul.f32 %v1031, 1.442695
        %v1033 = vpow.pop %v1032
        %v1034 = vmul.f32 %v1030, 0.0
        %v1035 = vsel %vm612, %v1033, 0.0
        %1036 = vadd.xlane.f32.xlu0 %v1035
        %v1037 = vpop.xlane.xlu0 %1036
        %v1038 = vadd.f32 %v1034, %v1037
        %1039 = vrot.lane.b32.xlu0 %v594, 48
        %v1040 = vpop.permute.xlu0 %1039
        %v1043 = vsel %vm612, %v1033, 0
        %1045 = vmatprep.subr.mxu0 0.0
        %1046 = vmatpush1.msra.mxu0 %v1040
        %1047 = vmatprep.subr.mxu0 0.0
        %1048 = vmatpush1.msra.mxu0 0.0
        %1049 = vmatprep.subr.mxu0 0.0
        %1050 = vmatpush1.msra.mxu0 0.0
        %1051 = vmatprep.subr.mxu0 0.0
        %1052 = vmatpush1.msra.mxu0 0.0
        %1053 = vmatprep.subr.mxu0 0.0
        %1054 = vmatpush1.msra.mxu0 0.0
        %1055 = vmatprep.subr.mxu0 0.0
        %1056 = vmatpush1.msra.mxu0 0.0
        %1057 = vmatprep.subr.mxu0 0.0
        %1058 = vmatpush1.msra.mxu0 0.0
        %1059 = vmatprep.subr.mxu0 0.0
        %1060 = vmatpush1.msra.mxu0 0.0
        %1061 = vmatprep.subr.mxu0 0.0
        %1062 = vmatpush1.msra.mxu0 0.0
        %1063 = vmatprep.subr.mxu0 0.0
        %1064 = vmatpush1.msra.mxu0 0.0
        %1065 = vmatprep.subr.mxu0 0.0
        %1066 = vmatpush1.msra.mxu0 0.0
        %1067 = vmatprep.subr.mxu0 0.0
        %1068 = vmatpush1.msra.mxu0 0.0
        %1069 = vmatprep.subr.mxu0 0.0
        %1070 = vmatpush1.msra.mxu0 0.0
        %1071 = vmatprep.subr.mxu0 0.0
        %1072 = vmatpush1.msra.mxu0 0.0
        %1073 = vmatprep.subr.mxu0 0.0
        %1074 = vmatpush1.msra.mxu0 0.0
        %1075 = vmatprep.subr.mxu0 0.0
        %1076 = vmatpush1.msra.mxu0 0.0
        %1077 = vmatprep.subr.mxu0 0.0
        %1078 = vmatpush1.msra.mxu0 0.0
        %1079 = vmatprep.subr.mxu0 0.0
        %1080 = vmatpush1.msra.mxu0 0.0
        %1081 = vmatprep.subr.mxu0 0.0
        %1082 = vmatpush1.msra.mxu0 0.0
        %1083 = vmatprep.subr.mxu0 0.0
        %1084 = vmatpush1.msra.mxu0 0.0
        %1085 = vmatprep.subr.mxu0 0.0
        %1086 = vmatpush1.msra.mxu0 0.0
        %1087 = vmatprep.subr.mxu0 0.0
        %1088 = vmatpush1.msra.mxu0 0.0
        %1089 = vmatprep.subr.mxu0 0.0
        %1090 = vmatpush1.msra.mxu0 0.0
        %1091 = vmatprep.subr.mxu0 0.0
        %1092 = vmatpush1.msra.mxu0 0.0
        %1093 = vmatprep.subr.mxu0 0.0
        %1094 = vmatpush1.msra.mxu0 0.0
        %1095 = vmatprep.subr.mxu0 0.0
        %1096 = vmatpush1.msra.mxu0 0.0
        %1097 = vmatprep.subr.mxu0 0.0
        %1098 = vmatpush1.msra.mxu0 0.0
        %1099 = vmatprep.subr.mxu0 0.0
        %1100 = vmatpush1.msra.mxu0 0.0
        %1101 = vmatprep.subr.mxu0 0.0
        %1102 = vmatpush1.msra.mxu0 0.0
        %1103 = vmatprep.subr.mxu0 0.0
        %1104 = vmatpush1.msra.mxu0 0.0
        %1105 = vmatprep.subr.mxu0 0.0
        %1106 = vmatpush1.msra.mxu0 0.0
        %1107 = vmatprep.subr.mxu0 0.0
        %1108 = vmatpush1.msra.mxu0 0.0
        %1109 = vmatprep.mubr.f32.mxu0 0.0
        %1110 = vmatmul.mubr.f32.gmra.mrb[0].mxu0 %v1043
        %v1111 = vpop.f32.mrb[0].mxu0
        %v1112 = vadd.f32 0.0, %v1111
        %v1113 = vpop.f32.mrb[0].mxu0
        %1114 = vdwg.mxu0
        %v1115 = vadd.f32 %v1034, %v1112
        %1116 = vrot.lane.b32.xlu0 %v594, 104
        %v1117 = vpop.permute.xlu0 %1116
        %1118 = vrot.lane.b32.xlu0 %v594, 72
        %v1119 = vpop.permute.xlu0 %1118
        %v1120 = vsel %vm612, %v1117, 0
        %v1122 = vsel %vm612, %v1119, 0
        %1124 = vmatprep.subr.mxu0 0.0
        %1125 = vmatpush1.xpose.msra.mxu0 %v1122
        %1126 = vmatprep.subr.mxu0 0.0
        %1127 = vmatpush1.xpose.msra.mxu0 0.0
        %1128 = vmatprep.subr.mxu0 0.0
        %1129 = vmatpush1.xpose.msra.mxu0 0.0
        %1130 = vmatprep.subr.mxu0 0.0
        %1131 = vmatpush1.xpose.msra.mxu0 0.0
        %1132 = vmatprep.subr.mxu0 0.0
        %1133 = vmatpush1.xpose.msra.mxu0 0.0
        %1134 = vmatprep.subr.mxu0 0.0
        %1135 = vmatpush1.xpose.msra.mxu0 0.0
        %1136 = vmatprep.subr.mxu0 0.0
        %1137 = vmatpush1.xpose.msra.mxu0 0.0
        %1138 = vmatprep.subr.mxu0 0.0
        %1139 = vmatpush1.xpose.msra.mxu0 0.0
        %1140 = vmatprep.subr.mxu0 0.0
        %1141 = vmatpush1.xpose.msra.mxu0 0.0
        %1142 = vmatprep.subr.mxu0 0.0
        %1143 = vmatpush1.xpose.msra.mxu0 0.0
        %1144 = vmatprep.subr.mxu0 0.0
        %1145 = vmatpush1.xpose.msra.mxu0 0.0
        %1146 = vmatprep.subr.mxu0 0.0
        %1147 = vmatpush1.xpose.msra.mxu0 0.0
        %1148 = vmatprep.subr.mxu0 0.0
        %1149 = vmatpush1.xpose.msra.mxu0 0.0
        %1150 = vmatprep.subr.mxu0 0.0
        %1151 = vmatpush1.xpose.msra.mxu0 0.0
        %1152 = vmatprep.subr.mxu0 0.0
        %1153 = vmatpush1.xpose.msra.mxu0 0.0
        %1154 = vmatprep.subr.mxu0 0.0
        %1155 = vmatpush1.xpose.msra.mxu0 0.0
        %1156 = vmatprep.subr.mxu0 0.0
        %1157 = vmatpush1.xpose.msra.mxu0 0.0
        %1158 = vmatprep.subr.mxu0 0.0
        %1159 = vmatpush1.xpose.msra.mxu0 0.0
        %1160 = vmatprep.subr.mxu0 0.0
        %1161 = vmatpush1.xpose.msra.mxu0 0.0
        %1162 = vmatprep.subr.mxu0 0.0
        %1163 = vmatpush1.xpose.msra.mxu0 0.0
        %1164 = vmatprep.subr.mxu0 0.0
        %1165 = vmatpush1.xpose.msra.mxu0 0.0
        %1166 = vmatprep.subr.mxu0 0.0
        %1167 = vmatpush1.xpose.msra.mxu0 0.0
        %1168 = vmatprep.subr.mxu0 0.0
        %1169 = vmatpush1.xpose.msra.mxu0 0.0
        %1170 = vmatprep.subr.mxu0 0.0
        %1171 = vmatpush1.xpose.msra.mxu0 0.0
        %1172 = vmatprep.subr.mxu0 0.0
        %1173 = vmatpush1.xpose.msra.mxu0 0.0
        %1174 = vmatprep.subr.mxu0 0.0
        %1175 = vmatpush1.xpose.msra.mxu0 0.0
        %1176 = vmatprep.subr.mxu0 0.0
        %1177 = vmatpush1.xpose.msra.mxu0 0.0
        %1178 = vmatprep.subr.mxu0 0.0
        %1179 = vmatpush1.xpose.msra.mxu0 0.0
        %1180 = vmatprep.subr.mxu0 0.0
        %1181 = vmatpush1.xpose.msra.mxu0 0.0
        %1182 = vmatprep.subr.mxu0 0.0
        %1183 = vmatpush1.xpose.msra.mxu0 0.0
        %1184 = vmatprep.subr.mxu0 0.0
        %1185 = vmatpush1.xpose.msra.mxu0 0.0
        %1186 = vmatprep.subr.mxu0 0.0
        %1187 = vmatpush1.xpose.msra.mxu0 0.0
        %1188 = vmatprep.mubr.f32.mxu0 0.0
        %1189 = vmatmul.mubr.f32.gmra.mrb[0].mxu0 %v1120
        %v1190 = vpop.f32.mrb[0].mxu0
        %v1191 = vadd.f32 0.0, %v1190
        %v1192 = vpop.f32.mrb[0].mxu0
        %1193 = vdwg.mxu0
        %v1194 = vsel %vm611, %v1191, -1e+10
        %v1195 = vsel %vm612, %v1194, -inf
        %1196 = vmax.xlane.f32.xlu0 %v1195
        %v1197 = vpop.xlane.xlu0 %1196
        %v1198 = vsub.f32 -inf, %v1197
        %v1199 = vmul.f32 %v1198, 1.442695
        %v1200 = vpow.pop %v1199
        %v1201 = vsub.f32 %v1194, %v1197
        %v1202 = vmul.f32 %v1201, 1.442695
        %v1203 = vpow.pop %v1202
        %v1204 = vmul.f32 %v1200, 0.0
        %v1205 = vsel %vm612, %v1203, 0.0
        %1206 = vadd.xlane.f32.xlu0 %v1205
        %v1207 = vpop.xlane.xlu0 %1206
        %v1208 = vadd.f32 %v1204, %v1207
        %1209 = vrot.lane.b32.xlu0 %v594, 40
        %v1210 = vpop.permute.xlu0 %1209
        %v1213 = vsel %vm612, %v1203, 0
        %1215 = vmatprep.subr.mxu0 0.0
        %1216 = vmatpush1.msra.mxu0 %v1210
        %1217 = vmatprep.subr.mxu0 0.0
        %1218 = vmatpush1.msra.mxu0 0.0
        %1219 = vmatprep.subr.mxu0 0.0
        %1220 = vmatpush1.msra.mxu0 0.0
        %1221 = vmatprep.subr.mxu0 0.0
        %1222 = vmatpush1.msra.mxu0 0.0
        %1223 = vmatprep.subr.mxu0 0.0
        %1224 = vmatpush1.msra.mxu0 0.0
        %1225 = vmatprep.subr.mxu0 0.0
        %1226 = vmatpush1.msra.mxu0 0.0
        %1227 = vmatprep.subr.mxu0 0.0
        %1228 = vmatpush1.msra.mxu0 0.0
        %1229 = vmatprep.subr.mxu0 0.0
        %1230 = vmatpush1.msra.mxu0 0.0
        %1231 = vmatprep.subr.mxu0 0.0
        %1232 = vmatpush1.msra.mxu0 0.0
        %1233 = vmatprep.subr.mxu0 0.0
        %1234 = vmatpush1.msra.mxu0 0.0
        %1235 = vmatprep.subr.mxu0 0.0
        %1236 = vmatpush1.msra.mxu0 0.0
        %1237 = vmatprep.subr.mxu0 0.0
        %1238 = vmatpush1.msra.mxu0 0.0
        %1239 = vmatprep.subr.mxu0 0.0
        %1240 = vmatpush1.msra.mxu0 0.0
        %1241 = vmatprep.subr.mxu0 0.0
        %1242 = vmatpush1.msra.mxu0 0.0
        %1243 = vmatprep.subr.mxu0 0.0
        %1244 = vmatpush1.msra.mxu0 0.0
        %1245 = vmatprep.subr.mxu0 0.0
        %1246 = vmatpush1.msra.mxu0 0.0
        %1247 = vmatprep.subr.mxu0 0.0
        %1248 = vmatpush1.msra.mxu0 0.0
        %1249 = vmatprep.subr.mxu0 0.0
        %1250 = vmatpush1.msra.mxu0 0.0
        %1251 = vmatprep.subr.mxu0 0.0
        %1252 = vmatpush1.msra.mxu0 0.0
        %1253 = vmatprep.subr.mxu0 0.0
        %1254 = vmatpush1.msra.mxu0 0.0
        %1255 = vmatprep.subr.mxu0 0.0
        %1256 = vmatpush1.msra.mxu0 0.0
        %1257 = vmatprep.subr.mxu0 0.0
        %1258 = vmatpush1.msra.mxu0 0.0
        %1259 = vmatprep.subr.mxu0 0.0
        %1260 = vmatpush1.msra.mxu0 0.0
        %1261 = vmatprep.subr.mxu0 0.0
        %1262 = vmatpush1.msra.mxu0 0.0
        %1263 = vmatprep.subr.mxu0 0.0
        %1264 = vmatpush1.msra.mxu0 0.0
        %1265 = vmatprep.subr.mxu0 0.0
        %1266 = vmatpush1.msra.mxu0 0.0
        %1267 = vmatprep.subr.mxu0 0.0
        %1268 = vmatpush1.msra.mxu0 0.0
        %1269 = vmatprep.subr.mxu0 0.0
        %1270 = vmatpush1.msra.mxu0 0.0
        %1271 = vmatprep.subr.mxu0 0.0
        %1272 = vmatpush1.msra.mxu0 0.0
        %1273 = vmatprep.subr.mxu0 0.0
        %1274 = vmatpush1.msra.mxu0 0.0
        %1275 = vmatprep.subr.mxu0 0.0
        %1276 = vmatpush1.msra.mxu0 0.0
        %1277 = vmatprep.subr.mxu0 0.0
        %1278 = vmatpush1.msra.mxu0 0.0
        %1279 = vmatprep.mubr.f32.mxu0 0.0
        %1280 = vmatmul.mubr.f32.gmra.mrb[0].mxu0 %v1213
        %v1281 = vpop.f32.mrb[0].mxu0
        %v1282 = vadd.f32 0.0, %v1281
        %v1283 = vpop.f32.mrb[0].mxu0
        %1284 = vdwg.mxu0
        %v1285 = vadd.f32 %v1204, %v1282
        %v1286 = vrcp.pop %v701
        %v1287 = vmul.f32 %v775, %v1286
        %v1288 = vrcp.pop %v868
        %v1289 = vmul.f32 %v945, %v1288
        %v1290 = vrcp.pop %v1038
        %v1291 = vmul.f32 %v1115, %v1290
        %v1292 = vrcp.pop %v1208
        %v1293 = vmul.f32 %v1285, %v1292
        %1295 = vrot.lane.b32.xlu0 %v1289, 8
        %v1296 = vpop.permute.xlu0 %1295
        %1299 = vrot.lane.b32.xlu0 %v1291, 16
        %v1300 = vpop.permute.xlu0 %1299
        %1303 = vrot.lane.b32.xlu0 %v1293, 24
        %v1304 = vpop.permute.xlu0 %1303
        %v1306 = vsel %vm612, %v1287, %v1296
        %vm1307 = vcmask 130048
        %v1308 = vsel %vm1307, %v1306, %v1300
        %vm1309 = vcmask 195584
        %v1310 = vsel %vm1309, %v1308, %v1304
        %v1311 = vld [vmem:[%s5] sm:$0xff]
        %v1312 = vld [vmem:[%s5 + $0x8] sm:$0xff]
        %v1313 = vld [vmem:[%s5 + $0x10] sm:$0xff]
        %v1314 = vld [vmem:[%s5 + $0x18] sm:$0xff]
        %v1315 = vld [vmem:[%s6] sm:$0x1]
        %v1317 = vlaneseq
        %v1318 = vshrl.u32 %v1317, 7
        %v1319 = vsub.s32 0, %v1318
        %v1320 = vrot.slane %v1315, %v1319
        %v1323 = vsel %vm477, %v1310, 0
        %1325 = vmatprep.subr.mxu0 0.0
        %1326 = vmatpush1.msra.mxu0 %v1311
        %1327 = vmatprep.subr.mxu0 0.0
        %1328 = vmatpush1.msra.mxu0 %v1312
        %1329 = vmatprep.subr.mxu0 0.0
        %1330 = vmatpush1.msra.mxu0 %v1313
        %1331 = vmatprep.subr.mxu0 0.0
        %1332 = vmatpush1.msra.mxu0 %v1314
        %1333 = vmatprep.subr.mxu0 0.0
        %1334 = vmatpush1.msra.mxu0 0.0
        %1335 = vmatprep.subr.mxu0 0.0
        %1336 = vmatpush1.msra.mxu0 0.0
        %1337 = vmatprep.subr.mxu0 0.0
        %1338 = vmatpush1.msra.mxu0 0.0
        %1339 = vmatprep.subr.mxu0 0.0
        %1340 = vmatpush1.msra.mxu0 0.0
        %1341 = vmatprep.subr.mxu0 0.0
        %1342 = vmatpush1.msra.mxu0 0.0
        %1343 = vmatprep.subr.mxu0 0.0
        %1344 = vmatpush1.msra.mxu0 0.0
        %1345 = vmatprep.subr.mxu0 0.0
        %1346 = vmatpush1.msra.mxu0 0.0
        %1347 = vmatprep.subr.mxu0 0.0
        %1348 = vmatpush1.msra.mxu0 0.0
        %1349 = vmatprep.subr.mxu0 0.0
        %1350 = vmatpush1.msra.mxu0 0.0
        %1351 = vmatprep.subr.mxu0 0.0
        %1352 = vmatpush1.msra.mxu0 0.0
        %1353 = vmatprep.subr.mxu0 0.0
        %1354 = vmatpush1.msra.mxu0 0.0
        %1355 = vmatprep.subr.mxu0 0.0
        %1356 = vmatpush1.msra.mxu0 0.0
        %1357 = vmatprep.subr.mxu0 0.0
        %1358 = vmatpush1.msra.mxu0 0.0
        %1359 = vmatprep.subr.mxu0 0.0
        %1360 = vmatpush1.msra.mxu0 0.0
        %1361 = vmatprep.subr.mxu0 0.0
        %1362 = vmatpush1.msra.mxu0 0.0
        %1363 = vmatprep.subr.mxu0 0.0
        %1364 = vmatpush1.msra.mxu0 0.0
        %1365 = vmatprep.subr.mxu0 0.0
        %1366 = vmatpush1.msra.mxu0 0.0
        %1367 = vmatprep.subr.mxu0 0.0
        %1368 = vmatpush1.msra.mxu0 0.0
        %1369 = vmatprep.subr.mxu0 0.0
        %1370 = vmatpush1.msra.mxu0 0.0
        %1371 = vmatprep.subr.mxu0 0.0
        %1372 = vmatpush1.msra.mxu0 0.0
        %1373 = vmatprep.subr.mxu0 0.0
        %1374 = vmatpush1.msra.mxu0 0.0
        %1375 = vmatprep.subr.mxu0 0.0
        %1376 = vmatpush1.msra.mxu0 0.0
        %1377 = vmatprep.subr.mxu0 0.0
        %1378 = vmatpush1.msra.mxu0 0.0
        %1379 = vmatprep.subr.mxu0 0.0
        %1380 = vmatpush1.msra.mxu0 0.0
        %1381 = vmatprep.subr.mxu0 0.0
        %1382 = vmatpush1.msra.mxu0 0.0
        %1383 = vmatprep.subr.mxu0 0.0
        %1384 = vmatpush1.msra.mxu0 0.0
        %1385 = vmatprep.subr.mxu0 0.0
        %1386 = vmatpush1.msra.mxu0 0.0
        %1387 = vmatprep.subr.mxu0 0.0
        %1388 = vmatpush1.msra.mxu0 0.0
        %1389 = vmatprep.mubr.f32.mxu0 0.0
        %1390 = vmatmul.mubr.f32.gmra.mrb[0].mxu0 %v1323
        %v1391 = vpop.f32.mrb[0].mxu0
        %v1392 = vadd.f32 %v1320, %v1391
        %v1393 = vpop.f32.mrb[0].mxu0
        %1394 = vdwg.mxu0
        %v1395 = vadd.f32 %v474, %v1392
        %v1396 = vld [vmem:[%s7] sm:$0x1]
        %v1397 = vld [vmem:[%s8] sm:$0x1]
        %v1398 = vsel %vm477, %v1395, 0.0
        %1399 = vadd.xlane.f32.xlu0 %v1398
        %v1400 = vpop.xlane.xlu0 %1399
        %v1401 = vmul.f32 %v1400, %v481
        %v1402 = vsub.f32 %v1395, %v1401
        %v1403 = vmul.f32 %v1402, %v1402
        %v1404 = vsel %vm477, %v1403, 0.0
        %1405 = vadd.xlane.f32.xlu0 %v1404
        %v1406 = vpop.xlane.xlu0 %1405
        %v1407 = vmul.f32 %v1406, %v481
        %v1408 = vadd.f32 %v1407, 1e-05
        %v1409 = vrsqrt.pop %v1408
        %v1410 = vmul.f32 %v1408, %v1409
        %vm1411 = vcmp.eq.f32.partialorder %v1408, inf
        %v1412 = vsel %vm1411, %v1408, %v1410
        %vm1413 = vcmp.eq.f32.partialorder %v1408, 0.0
        %v1414 = vand.u32 %v1408, 2147483648
        %v1415 = vsel %vm1413, %v1414, %v1412
        %v1416 = vrcp.pop %v1415
        %v1417 = vmul.f32 %v1402, %v1416
        %v1419 = vlaneseq
        %v1420 = vshrl.u32 %v1419, 7
        %v1421 = vsub.s32 0, %v1420
        %v1422 = vrot.slane %v1396, %v1421
        %v1424 = vmul.f32 %v1417, %v1422
        %v1426 = vlaneseq
        %v1427 = vshrl.u32 %v1426, 7
        %v1428 = vsub.s32 0, %v1427
        %v1429 = vrot.slane %v1397, %v1428
        %v1431 = vadd.f32 %v1424, %v1429
        %v1432 = vld [vmem:[%s9] sm:$0xff]
        %v1433 = vld [vmem:[%s9 + $0x8] sm:$0xff]
        %v1434 = vld [vmem:[%s9 + $0x10] sm:$0xff]
        %v1435 = vld [vmem:[%s9 + $0x18] sm:$0xff]
        %v1436 = vld [vmem:[%s10] sm:$0x1]
        %v1438 = vlaneseq
        %v1439 = vshrl.u32 %v1438, 7
        %v1440 = vsub.s32 0, %v1439
        %v1441 = vrot.slane %v1436, %v1440
        %v1444 = vsel %vm477, %v1431, 0
        %1446 = vmatprep.subr.mxu0 0.0
        %1447 = vmatpush1.msra.mxu0 %v1432
        %1448 = vmatprep.subr.mxu0 0.0
        %1449 = vmatpush1.msra.mxu0 %v1433
        %1450 = vmatprep.subr.mxu0 0.0
        %1451 = vmatpush1.msra.mxu0 %v1434
        %1452 = vmatprep.subr.mxu0 0.0
        %1453 = vmatpush1.msra.mxu0 %v1435
        %1454 = vmatprep.subr.mxu0 0.0
        %1455 = vmatpush1.msra.mxu0 0.0
        %1456 = vmatprep.subr.mxu0 0.0
        %1457 = vmatpush1.msra.mxu0 0.0
        %1458 = vmatprep.subr.mxu0 0.0
        %1459 = vmatpush1.msra.mxu0 0.0
        %1460 = vmatprep.subr.mxu0 0.0
        %1461 = vmatpush1.msra.mxu0 0.0
        %1462 = vmatprep.subr.mxu0 0.0
        %1463 = vmatpush1.msra.mxu0 0.0
        %1464 = vmatprep.subr.mxu0 0.0
        %1465 = vmatpush1.msra.mxu0 0.0
        %1466 = vmatprep.subr.mxu0 0.0
        %1467 = vmatpush1.msra.mxu0 0.0
        %1468 = vmatprep.subr.mxu0 0.0
        %1469 = vmatpush1.msra.mxu0 0.0
        %1470 = vmatprep.subr.mxu0 0.0
        %1471 = vmatpush1.msra.mxu0 0.0
        %1472 = vmatprep.subr.mxu0 0.0
        %1473 = vmatpush1.msra.mxu0 0.0
        %1474 = vmatprep.subr.mxu0 0.0
        %1475 = vmatpush1.msra.mxu0 0.0
        %1476 = vmatprep.subr.mxu0 0.0
        %1477 = vmatpush1.msra.mxu0 0.0
        %1478 = vmatprep.subr.mxu0 0.0
        %1479 = vmatpush1.msra.mxu0 0.0
        %1480 = vmatprep.subr.mxu0 0.0
        %1481 = vmatpush1.msra.mxu0 0.0
        %1482 = vmatprep.subr.mxu0 0.0
        %1483 = vmatpush1.msra.mxu0 0.0
        %1484 = vmatprep.subr.mxu0 0.0
        %1485 = vmatpush1.msra.mxu0 0.0
        %1486 = vmatprep.subr.mxu0 0.0
        %1487 = vmatpush1.msra.mxu0 0.0
        %1488 = vmatprep.subr.mxu0 0.0
        %1489 = vmatpush1.msra.mxu0 0.0
        %1490 = vmatprep.subr.mxu0 0.0
        %1491 = vmatpush1.msra.mxu0 0.0
        %1492 = vmatprep.subr.mxu0 0.0
        %1493 = vmatpush1.msra.mxu0 0.0
        %1494 = vmatprep.subr.mxu0 0.0
        %1495 = vmatpush1.msra.mxu0 0.0
        %1496 = vmatprep.subr.mxu0 0.0
        %1497 = vmatpush1.msra.mxu0 0.0
        %1498 = vmatprep.subr.mxu0 0.0
        %1499 = vmatpush1.msra.mxu0 0.0
        %1500 = vmatprep.subr.mxu0 0.0
        %1501 = vmatpush1.msra.mxu0 0.0
        %1502 = vmatprep.subr.mxu0 0.0
        %1503 = vmatpush1.msra.mxu0 0.0
        %1504 = vmatprep.subr.mxu0 0.0
        %1505 = vmatpush1.msra.mxu0 0.0
        %1506 = vmatprep.subr.mxu0 0.0
        %1507 = vmatpush1.msra.mxu0 0.0
        %1508 = vmatprep.subr.mxu0 0.0
        %1509 = vmatpush1.msra.mxu0 0.0
        %1510 = vmatprep.mubr.f32.mxu0 0.0
        %1511 = vmatmul.mubr.f32.gmra.mrb[0].mxu0 %v1444
        %v1512 = vpop.f32.mrb[0].mxu0
        %v1513 = vadd.f32 %v1441, %v1512
        %v1514 = vpop.f32.mrb[0].mxu0
        %1515 = vdwg.mxu0
        %v1516 = vmul.f32 %v1513, 0.5
        %v1517 = vmul.f32 %v1513, 0.044715
        %v1518 = vmul.f32 %v1517, %v1513
        %v1519 = vmul.f32 %v1518, %v1513
        %v1520 = vadd.f32 %v1513, %v1519
        %v1521 = vmul.f32 %v1520, 0.7978845
        %v1522 = vtanh.pop %v1521
        %v1523 = vadd.f32 %v1522, 1.0
        %v1524 = vmul.f32 %v1516, %v1523
        %v1525 = vld [vmem:[%s11] sm:$0xff]
        %v1526 = vld [vmem:[%s11 + $0x8] sm:$0xff]
        %v1527 = vld [vmem:[%s11 + $0x10] sm:$0xff]
        %v1528 = vld [vmem:[%s11 + $0x18] sm:$0xff]
        %v1529 = vld [vmem:[%s11 + $0x20] sm:$0xff]
        %v1530 = vld [vmem:[%s11 + $0x28] sm:$0xff]
        %v1531 = vld [vmem:[%s11 + $0x30] sm:$0xff]
        %v1532 = vld [vmem:[%s11 + $0x38] sm:$0xff]
        %v1533 = vld [vmem:[%s11 + $0x40] sm:$0xff]
        %v1534 = vld [vmem:[%s11 + $0x48] sm:$0xff]
        %v1535 = vld [vmem:[%s11 + $0x50] sm:$0xff]
        %v1536 = vld [vmem:[%s11 + $0x58] sm:$0xff]
        %v1537 = vld [vmem:[%s11 + $0x60] sm:$0xff]
        %v1538 = vld [vmem:[%s11 + $0x68] sm:$0xff]
        %v1539 = vld [vmem:[%s11 + $0x70] sm:$0xff]
        %v1540 = vld [vmem:[%s11 + $0x78] sm:$0xff]
        %v1541 = vld [vmem:[%s12] sm:$0x1]
        %v1543 = vlaneseq
        %v1544 = vshrl.u32 %v1543, 7
        %v1545 = vsub.s32 0, %v1544
        %v1546 = vrot.slane %v1541, %v1545
        %1548 = vmatprep.subr.mxu0 0.0
        %1549 = vmatpush1.msra.mxu0 %v1525
        %1550 = vmatprep.subr.mxu0 0.0
        %1551 = vmatpush1.msra.mxu0 %v1526
        %1552 = vmatprep.subr.mxu0 0.0
        %1553 = vmatpush1.msra.mxu0 %v1527
        %1554 = vmatprep.subr.mxu0 0.0
        %1555 = vmatpush1.msra.mxu0 %v1528
        %1556 = vmatprep.subr.mxu0 0.0
        %1557 = vmatpush1.msra.mxu0 %v1529
        %1558 = vmatprep.subr.mxu0 0.0
        %1559 = vmatpush1.msra.mxu0 %v1530
        %1560 = vmatprep.subr.mxu0 0.0
        %1561 = vmatpush1.msra.mxu0 %v1531
        %1562 = vmatprep.subr.mxu0 0.0
        %1563 = vmatpush1.msra.mxu0 %v1532
        %1564 = vmatprep.subr.mxu0 0.0
        %1565 = vmatpush1.msra.mxu0 %v1533
        %1566 = vmatprep.subr.mxu0 0.0
        %1567 = vmatpush1.msra.mxu0 %v1534
        %1568 = vmatprep.subr.mxu0 0.0
        %1569 = vmatpush1.msra.mxu0 %v1535
        %1570 = vmatprep.subr.mxu0 0.0
        %1571 = vmatpush1.msra.mxu0 %v1536
        %1572 = vmatprep.subr.mxu0 0.0
        %1573 = vmatpush1.msra.mxu0 %v1537
        %1574 = vmatprep.subr.mxu0 0.0
        %1575 = vmatpush1.msra.mxu0 %v1538
        %1576 = vmatprep.subr.mxu0 0.0
        %1577 = vmatpush1.msra.mxu0 %v1539
        %1578 = vmatprep.subr.mxu0 0.0
        %1579 = vmatpush1.msra.mxu0 %v1540
        %1580 = vmatprep.subr.mxu0 0.0
        %1581 = vmatpush1.msra.mxu0 0.0
        %1582 = vmatprep.subr.mxu0 0.0
        %1583 = vmatpush1.msra.mxu0 0.0
        %1584 = vmatprep.subr.mxu0 0.0
        %1585 = vmatpush1.msra.mxu0 0.0
        %1586 = vmatprep.subr.mxu0 0.0
        %1587 = vmatpush1.msra.mxu0 0.0
        %1588 = vmatprep.subr.mxu0 0.0
        %1589 = vmatpush1.msra.mxu0 0.0
        %1590 = vmatprep.subr.mxu0 0.0
        %1591 = vmatpush1.msra.mxu0 0.0
        %1592 = vmatprep.subr.mxu0 0.0
        %1593 = vmatpush1.msra.mxu0 0.0
        %1594 = vmatprep.subr.mxu0 0.0
        %1595 = vmatpush1.msra.mxu0 0.0
        %1596 = vmatprep.subr.mxu0 0.0
        %1597 = vmatpush1.msra.mxu0 0.0
        %1598 = vmatprep.subr.mxu0 0.0
        %1599 = vmatpush1.msra.mxu0 0.0
        %1600 = vmatprep.subr.mxu0 0.0
        %1601 = vmatpush1.msra.mxu0 0.0
        %1602 = vmatprep.subr.mxu0 0.0
        %1603 = vmatpush1.msra.mxu0 0.0
        %1604 = vmatprep.subr.mxu0 0.0
        %1605 = vmatpush1.msra.mxu0 0.0
        %1606 = vmatprep.subr.mxu0 0.0
        %1607 = vmatpush1.msra.mxu0 0.0
        %1608 = vmatprep.subr.mxu0 0.0
        %1609 = vmatpush1.msra.mxu0 0.0
        %1610 = vmatprep.subr.mxu0 0.0
        %1611 = vmatpush1.msra.mxu0 0.0
        %1612 = vmatprep.mubr.f32.mxu0 0.0
        %1613 = vmatmul.mubr.f32.gmra.mrb[0].mxu0 %v1524
        %v1614 = vpop.f32.mrb[0].mxu0
        %v1615 = vadd.f32 %v1546, %v1614
        %v1616 = vpop.f32.mrb[0].mxu0
        %1617 = vdwg.mxu0
        %v1618 = vadd.f32 %v1395, %v1615
        %1619 = vst.msk [vmem:[%s462] sm:$0xff] %vm477, %v1618
        %s1620 = sand.u32 %s318, 1
        %s1621 = scalar_lea.sflag [#allocation3], %s1620
        %s1622 = sand.u32 %s318, 1
        %s1623 = smul.addr %s1622, 8
        %s1624 = scalar_lea.vmem [#allocation2], %s1623
        %s1625 = sand.u32 %s344, 1
        %s1626 = scalar_lea.sflag [#allocation5], %s1625
        %s1627 = sand.u32 %s344, 1
        %s1628 = smul.addr %s1627, 16
        %s1629 = scalar_lea.vmem [#allocation4], %s1628
        // Predicated region
        $region73: #{tpu_custom_call.1} parent=71 // pred_check
          %p1630 = pneg %p328
        $region74: #{tpu_custom_call.1} parent=71 // pred_check_branch
          %1632 = sbr.rel (%p1630) target = $region76
        $region75: #{tpu_custom_call.1} parent=71 // pred_region
          %s1634 = ssub.s32 128, 128
          %1635 = vsyncadd %s1621, %s1634
          %s1636 = smul.addr %s32, 128
          %s1637 = scalar_lea.hbm %s13, %s1636
          %s1639 = sshll.u32 %s1624, 4
          %s1640 = int_to_ptr.vmem [resolvable:$true] %s1639
          %1642 = dma.vmem_to_hbm [thread:$0]  %s1640, 128, %s1637, %s1621
        $region76: #{tpu_custom_call.1} parent=71 // pred_fallthru
          _
        // Predicated region
        $region77: #{tpu_custom_call.1} parent=71 // pred_check
          %p1643 = pneg %p354
        $region78: #{tpu_custom_call.1} parent=71 // pred_check_branch
          %1645 = sbr.rel (%p1643) target = $region80
        $region79: #{tpu_custom_call.1} parent=71 // pred_region
          %s1647 = ssub.s32 256, 256
          %1648 = vsyncadd %s1626, %s1647
          %s1649 = smul.addr %s32, 128
          %s1650 = scalar_lea.hbm %s14, %s1649
          %s1651 = sshll.u32 %s1629, 4
          %s1652 = int_to_ptr.vmem [resolvable:$true] %s1651
          %1657 = dma.vmem_to_hbm [thread:$0]  %s1652, 256, %s1650, %s1626, 128, 256, 8
        $region80: #{tpu_custom_call.1} parent=71 // pred_fallthru
          _
      $region72: #{tpu_custom_call.1} parent=5 // pred_fallthru
        _
      %p1658 = scmp.le.s32.totalorder 2, %s27
      // Predicated region
      $region81: #{tpu_custom_call.1} parent=5 // pred_check
        %p1659 = pneg %p1658
      $region82: #{tpu_custom_call.1} parent=5 // pred_check_branch
        %1661 = sbr.rel (%p1659) target = $region84
      $region83: #{tpu_custom_call.1} parent=5 // pred_region
        %s1662 = ssub.s32 %s27, 2
        // Predicated region
        $region85: #{tpu_custom_call.1} parent=83 // pred_check
          %p1663 = pneg %p334
        $region86: #{tpu_custom_call.1} parent=83 // pred_check_branch
          %1665 = sbr.rel (%p1663) target = $region88
        $region87: #{tpu_custom_call.1} parent=83 // pred_region
          %s1666 = sand.u32 %s319, 1
          %s1667 = scalar_lea.sflag [#allocation3], %s1666
          %s1668 = sand.u32 %s319, 1
          %s1669 = smul.addr %s1668, 8
          %s1670 = scalar_lea.vmem [#allocation2], %s1669
          %1671 = dma.done %s1667, 128
        $region88: #{tpu_custom_call.1} parent=83 // pred_fallthru
          _
        // Predicated region
        $region89: #{tpu_custom_call.1} parent=83 // pred_check
          %p1672 = pneg %p360
        $region90: #{tpu_custom_call.1} parent=83 // pred_check_branch
          %1674 = sbr.rel (%p1672) target = $region92
        $region91: #{tpu_custom_call.1} parent=83 // pred_region
          %s1675 = sand.u32 %s345, 1
          %s1676 = scalar_lea.sflag [#allocation5], %s1675
          %s1677 = sand.u32 %s345, 1
          %s1678 = smul.addr %s1677, 16
          %s1679 = scalar_lea.vmem [#allocation4], %s1678
          %1680 = dma.done %s1676, 256
        $region92: #{tpu_custom_call.1} parent=83 // pred_fallthru
          _
      $region84: #{tpu_custom_call.1} parent=5 // pred_fallthru
        _
    $region6: #{tpu_custom_call.1} parent=1 // loop_footer
      %s31 = sadd.s32 1, %s27
    $region7: #{tpu_custom_call.1} parent=1 // loop_footer_branch
      %26 = sbr.rel target = $region3
    $region8: #{tpu_custom_call.1} parent=1 // loop_exit
      _
    %1681 = vsyncpa [#allocation3], 1
    %s1682 = scalar_lea.sflag [#allocation3], 1
    %1683 = vsyncpa %s1682, 1
    %1684 = vsyncpa [#allocation5], 1
    %s1685 = scalar_lea.sflag [#allocation5], 1
    %1686 = vsyncpa %s1685, 1

</llo_original>
